<compile_context>
chip_gen: v6e
topology: v6e:2x2x1
jax: 0.10.0
libtpu: 0.0.40
codegen_flags: <defaults>
</compile_context>

<pallas_src>
import functools

import jax
import jax.numpy as jnp
from jax.experimental import pallas as pl
from jax.experimental.pallas import tpu as pltpu


def _round_up(x, m):
    return (x + m - 1) // m * m


def _lstm_classifier_kernel(emb_ref,    # VMEM (T*B_t, 2E) f32  time-aligned fwd|bwd embeddings
                            wih_ref,    # VMEM (2E, 8H)    f32  block-structured, gate-packed W_ih^T
                            whh_ref,    # VMEM (2H, 8H)    f32  block-structured, gate-packed W_hh^T
                            b_ref,      # VMEM (1, 8H)     f32  packed bias (b_ih + b_hh)
                            fcw_ref,    # VMEM (2H, Cp)    f32  fc weight^T (lane padded)
                            fcb_ref,    # VMEM (1, Cp)     f32  fc bias (lane padded)
                            out_ref,    # VMEM (B_t, Cp)   f32
                            xp_ref):    # VMEM scratch (T*B_t, 8H) f32
    b_t = out_ref.shape[0]
    seq_len = emb_ref.shape[0] // b_t
    hid = whh_ref.shape[0] // 2

    # ---- hoisted input projection (both directions, all gates) + bias fold ---
    # Row block s of xp holds the time-aligned fwd (t=s) and bwd (t=T-1-s) gate
    # inputs; one big MXU matmul, completely off the serial recurrence chain.
    xp_ref[...] = (
        jnp.dot(emb_ref[...], wih_ref[...], preferred_element_type=jnp.float32)
        + b_ref[...])

    whh = whh_ref[...]

    # ---- merged forward + backward recurrence --------------------------------
    # h/c carry both directions: cols [0:H) = forward, [H:2H) = backward.
    # Gate columns: [i_f,i_b | f_f,f_b | o_f,o_b | g_f,g_b]  (each block H wide).
    def step(s, carry):
        h, c = carry
        row0 = pl.multiple_of(s * b_t, b_t)
        xg = xp_ref[pl.ds(row0, b_t), :]                              # (B_t, 8H)
        gates = xg + jnp.dot(h.astype(whh.dtype), whh,
                             preferred_element_type=jnp.float32)
        sig = jax.nn.sigmoid(gates[:, :6 * hid])      # i|f|o, both directions
        g_g = jnp.tanh(gates[:, 6 * hid:])            # g,     both directions
        i_g = sig[:, 0 * hid:2 * hid]
        f_g = sig[:, 2 * hid:4 * hid]
        o_g = sig[:, 4 * hid:6 * hid]
        c = f_g * c + i_g * g_g
        h = o_g * jnp.tanh(c)
        return h, c

    h0 = jnp.zeros((b_t, 2 * hid), jnp.float32)
    c0 = jnp.zeros((b_t, 2 * hid), jnp.float32)
    unroll = True if seq_len <= 16 else 2
    h, _ = jax.lax.fori_loop(0, seq_len, step, (h0, c0), unroll=unroll)

    # h == concat([h_fwd_final, h_bwd_final], 1) == cat((hidden[-2], hidden[-1]), 1)
    # dropout(eval) == identity
    out_ref[...] = (
        jnp.dot(h.astype(fcw_ref.dtype), fcw_ref[...],
                preferred_element_type=jnp.float32)
        + fcb_ref[...])


def _pack_dir_gates(w_fwd, w_bwd, hid):
    """Per-direction cols [i,f,g,o] -> [i_f,i_b,f_f,f_b,o_f,o_b,g_f,g_b].

    Sigmoid then covers one contiguous slice [0:6H), tanh covers [6H:8H).
    """
    parts = []
    for g in (0, 1, 3, 2):                       # i, f, o, g
        parts.append(w_fwd[..., g * hid:(g + 1) * hid])
        parts.append(w_bwd[..., g * hid:(g + 1) * hid])
    return jnp.concatenate(parts, axis=-1)


@functools.partial(jax.jit, static_argnames=("num_classes",))
def intent_classifier_forward(tokens, params, num_classes):
    """tokens: int32 (B, T); params: dict of f32 arrays. Returns (B, num_classes)."""
    B, T = tokens.shape
    table = params["embedding"]
    V, E = table.shape
    H = params["whh_f_T"].shape[0]
    C = num_classes
    wdt = jnp.float32                            # TODO(synk): bf16 on v6e/v7x

    # ---- batch tiling --------------------------------------------------------
    B_TILE = min(128, _round_up(B, 8))
    # keep x_proj scratch + emb block comfortably inside VMEM
    while B_TILE > 8 and T * B_TILE * (8 * H + 4 * E) * 4 > (8 << 20):
        B_TILE = max(8, (B_TILE // 2) - (B_TILE // 2) % 8)
    B_pad = _round_up(B, B_TILE)
    n_tiles = B_pad // B_TILE
    C_pad = _round_up(C, 128)                    # lane-dense output store

    # ---- weight packing (tiny XLA glue) --------------------------------------
    zE = jnp.zeros((E, 4 * H), jnp.float32)
    zH = jnp.zeros((H, 4 * H), jnp.float32)
    w_ih = jnp.concatenate([
        _pack_dir_gates(params["wih_f_T"], zE, H),   # rows 0:E  <- forward-time emb
        _pack_dir_gates(zE, params["wih_b_T"], H),   # rows E:2E <- backward-time emb
    ], axis=0).astype(wdt)                           # (2E, 8H)
    w_hh = jnp.concatenate([
        _pack_dir_gates(params["whh_f_T"], zH, H),   # rows 0:H  <- h_fwd
        _pack_dir_gates(zH, params["whh_b_T"], H),   # rows H:2H <- h_bwd
    ], axis=0).astype(wdt)                           # (2H, 8H)
    bias = _pack_dir_gates(params["b_f"], params["b_b"], H)          # (1, 8H) f32
    fcw = jnp.pad(params["fcw_T"], ((0, 0), (0, C_pad - C))).astype(wdt)
    fcb = jnp.pad(params["fcb"], ((0, 0), (0, C_pad - C)))           # (1, Cp) f32

    # ---- embedding pre-gather in XLA, time-aligned fwd|bwd layout ------------
    tok = jnp.clip(tokens, 0, V - 1)                 # guard out-of-range ids
    emb = table.astype(wdt)[tok]                     # (B, T, E)
    emb_f = jnp.swapaxes(emb, 0, 1)                  # (T, B, E)   forward time
    emb_b = emb_f[::-1]                              # (T, B, E)   reversed time
    emb_cat = jnp.concatenate([emb_f, emb_b], axis=-1)               # (T, B, 2E)
    emb_cat = jnp.pad(emb_cat, ((0, 0), (0, B_pad - B), (0, 0)))
    # one lane-dense slab per batch tile: row (t*B_TILE + b) holds fwd t / bwd T-1-t
    emb_tiles = (emb_cat.reshape(T, n_tiles, B_TILE, 2 * E)
                 .transpose(1, 0, 2, 3)
                 .reshape(n_tiles, T * B_TILE, 2 * E))

    grid_spec = pltpu.PrefetchScalarGridSpec(
        num_scalar_prefetch=0,
        grid=(n_tiles,),
        in_specs=[
            pl.BlockSpec((None, T * B_TILE, 2 * E), lambda i: (i, 0, 0)),  # emb slab
            pl.BlockSpec((2 * E, 8 * H), lambda i: (0, 0)),                # W_ih
            pl.BlockSpec((2 * H, 8 * H), lambda i: (0, 0)),                # W_hh
            pl.BlockSpec((1, 8 * H), lambda i: (0, 0)),                    # bias
            pl.BlockSpec((2 * H, C_pad), lambda i: (0, 0)),                # fc weight
            pl.BlockSpec((1, C_pad), lambda i: (0, 0)),                    # fc bias
        ],
        out_specs=pl.BlockSpec((B_TILE, C_pad), lambda i: (i, 0)),
        scratch_shapes=[pltpu.VMEM((T * B_TILE, 8 * H), jnp.float32)],
    )

    out = pl.pallas_call(
        _lstm_classifier_kernel,
        out_shape=jax.ShapeDtypeStruct((B_pad, C_pad), jnp.float32),
        grid_spec=grid_spec,
        compiler_params=pltpu.CompilerParams(
            dimension_semantics=("parallel",),        # shard batch tiles across TCs
            vmem_limit_bytes=64 * 1024 * 1024),
    )(emb_tiles, w_ih, w_hh, bias, fcw, fcb)
    return out[:B, :C]


def init_params(key, input_size, hidden_size, embedding_dim, num_classes):
    H, E, C = hidden_size, embedding_dim, num_classes
    ks = jax.random.split(key, 12)
    klstm = 1.0 / jnp.sqrt(H)
    kfc = 1.0 / jnp.sqrt(2 * H)

    def u(k, shape, bound):
        return jax.random.uniform(k, shape, jnp.float32, -bound, bound)

    params = {
        # nn.Embedding default init: N(0, 1)
        "embedding": jax.random.normal(ks[0], (input_size, E), jnp.float32),
        # forward-direction LSTM weights (stored transposed: (in, 4H), cols [i,f,g,o])
        "wih_f_T": u(ks[1], (E, 4 * H), klstm),
        "whh_f_T": u(ks[2], (H, 4 * H), klstm),
        "b_f": u(ks[3], (1, 4 * H), klstm) + u(ks[4], (1, 4 * H), klstm),
        # reverse-direction LSTM weights
        "wih_b_T": u(ks[5], (E, 4 * H), klstm),
        "whh_b_T": u(ks[6], (H, 4 * H), klstm),
        "b_b": u(ks[7], (1, 4 * H), klstm) + u(ks[8], (1, 4 * H), klstm),
        # fc
        "fcw_T": u(ks[9], (2 * H, C), kfc),
        "fcb": u(ks[10], (1, C), kfc),
    }
    return params


def _reference_forward(tokens, params):
    """Pure-JAX reference mirroring the PyTorch module (eval mode)."""
    emb = params["embedding"][tokens]
    B, T, E = emb.shape
    H = params["whh_f_T"].shape[0]

    def run(time_indices, wih, whh, b):
        h = jnp.zeros((B, H), jnp.float32)
        c = jnp.zeros((B, H), jnp.float32)
        for t in time_indices:
            g = emb[:, t, :] @ wih + h @ whh + b
            i = jax.nn.sigmoid(g[:, :H])
            f = jax.nn.sigmoid(g[:, H:2 * H])
            gg = jnp.tanh(g[:, 2 * H:3 * H])
            o = jax.nn.sigmoid(g[:, 3 * H:])
            c = f * c + i * gg
            h = o * jnp.tanh(c)
        return h

    h_f = run(range(T), params["wih_f_T"], params["whh_f_T"], params["b_f"])
    h_b = run(reversed(range(T)), params["wih_b_T"], params["whh_b_T"], params["b_b"])
    hidden = jnp.concatenate([h_f, h_b], axis=1)
    return hidden @ params["fcw_T"] + params["fcb"]


if __name__ == "__main__":
    # Small, module-consistent shapes.
    input_size = 20       # vocab
    hidden_size = 32
    embedding_dim = 32
    num_classes = 5
    batch, seq = 2, 8

    key = jax.random.PRNGKey(0)
    kp, kx = jax.random.split(key)
    params = init_params(kp, input_size, hidden_size, embedding_dim, num_classes)
    tokens = jax.random.randint(kx, (batch, seq), 0, input_size, dtype=jnp.int32)

    out = intent_classifier_forward(tokens, params, num_classes=num_classes)
    out = jax.block_until_ready(out)

    ref = _reference_forward(tokens, params)
    assert out.shape == (batch, num_classes)
    assert jnp.allclose(out, ref, atol=5e-4, rtol=5e-4)

    print("KERNEL_OK")
</pallas_src>

<mosaic_0001>
module attributes {stable_mosaic.version = 11 : i64} {
  func.func @_lstm_classifier_kernel(%arg0: i32, %arg1: memref<1x64x64xf32, #tpu.memory_space<vmem>>, %arg2: memref<64x256xf32, #tpu.memory_space<vmem>>, %arg3: memref<64x256xf32, #tpu.memory_space<vmem>>, %arg4: memref<1x256xf32, #tpu.memory_space<vmem>>, %arg5: memref<64x128xf32, #tpu.memory_space<vmem>>, %arg6: memref<1x128xf32, #tpu.memory_space<vmem>>, %arg7: memref<8x128xf32, #tpu.memory_space<vmem>>, %arg8: memref<64x256xf32, #tpu.memory_space<vmem>>) attributes {dimension_semantics = [#tpu.dimension_semantics<parallel>], iteration_bounds = array<i64: 1>, scalar_prefetch = 0 : i64, scratch_operands = 1 : i64, tpu.core_type = #tpu.core_type<tc>, window_params = [{transform_indices = @transform_0, window_bounds = array<i64: 1, 64, 64>}, {pipeline_mode = #tpu.pipeline_mode<synchronous>, transform_indices = @transform_1, window_bounds = array<i64: 64, 256>}, {pipeline_mode = #tpu.pipeline_mode<synchronous>, transform_indices = @transform_2, window_bounds = array<i64: 64, 256>}, {pipeline_mode = #tpu.pipeline_mode<synchronous>, transform_indices = @transform_3, window_bounds = array<i64: 1, 256>}, {pipeline_mode = #tpu.pipeline_mode<synchronous>, transform_indices = @transform_4, window_bounds = array<i64: 64, 128>}, {pipeline_mode = #tpu.pipeline_mode<synchronous>, transform_indices = @transform_5, window_bounds = array<i64: 1, 128>}, {transform_indices = @transform_6, window_bounds = array<i64: 8, 128>}]} {
    %c0 = arith.constant 0 : index
    %c0_0 = arith.constant 0 : index
    %c0_1 = arith.constant 0 : index
    %0 = vector.load %arg1[%c0, %c0_0, %c0_1] : memref<1x64x64xf32, #tpu.memory_space<vmem>>, vector<1x64x64xf32>
    %1 = vector.shape_cast %0 : vector<1x64x64xf32> to vector<64x64xf32>
    %c0_2 = arith.constant 0 : index
    %c0_3 = arith.constant 0 : index
    %2 = vector.load %arg2[%c0_2, %c0_3] : memref<64x256xf32, #tpu.memory_space<vmem>>, vector<64x256xf32>
    %cst = arith.constant dense<0.000000e+00> : vector<64x256xf32>
    %3 = tpu.matmul %1, %2, %cst {dimension_numbers = #tpu.dot_dimension_numbers<[1], [0], [0], [1], [0, 0, 1, 1], [], []>} : vector<64x64xf32>, vector<64x256xf32>, vector<64x256xf32> -> vector<64x256xf32>
    %c0_4 = arith.constant 0 : index
    %c0_5 = arith.constant 0 : index
    %4 = vector.load %arg4[%c0_4, %c0_5] : memref<1x256xf32, #tpu.memory_space<vmem>>, vector<1x256xf32>
    %5 = vector.broadcast %4 : vector<1x256xf32> to vector<64x256xf32>
    %6 = arith.addf %3, %5 : vector<64x256xf32>
    %c0_6 = arith.constant 0 : index
    %c0_7 = arith.constant 0 : index
    %7 = vector.load %arg8[%c0_6, %c0_7] : memref<64x256xf32, #tpu.memory_space<vmem>>, vector<64x256xf32>
    tpu.vector_store %arg8[%c0_6, %c0_7], %6 {strides = array<i32>} : memref<64x256xf32, #tpu.memory_space<vmem>>, vector<64x256xf32>,
    %c0_8 = arith.constant 0 : index
    %c0_9 = arith.constant 0 : index
    %8 = vector.load %arg3[%c0_8, %c0_9] : memref<64x256xf32, #tpu.memory_space<vmem>>, vector<64x256xf32>
    %cst_10 = arith.constant 0.000000e+00 : f32
    %9 = vector.broadcast %cst_10 : f32 to vector<8x64xf32>
    %cst_11 = arith.constant 0.000000e+00 : f32
    %10 = vector.broadcast %cst_11 : f32 to vector<8x64xf32>
    %c0_i32 = arith.constant 0 : i32
    %c8_i32 = arith.constant 8 : i32
    %11 = arith.muli %c0_i32, %c8_i32 : i32
    %12 = tpu.assume_multiple %11, 8 : i32
    %13 = arith.index_cast %12 : i32 to index
    %c0_12 = arith.constant 0 : index
    %14 = vector.load %arg8[%13, %c0_12] : memref<64x256xf32, #tpu.memory_space<vmem>>, vector<8x256xf32>
    %cst_13 = arith.constant dense<0.000000e+00> : vector<8x256xf32>
    %15 = tpu.matmul %9, %8, %cst_13 {dimension_numbers = #tpu.dot_dimension_numbers<[1], [0], [0], [1], [0, 0, 1, 1], [], []>} : vector<8x64xf32>, vector<64x256xf32>, vector<8x256xf32> -> vector<8x256xf32>
    %16 = arith.addf %14, %15 : vector<8x256xf32>
    %17 = vector.extract_strided_slice %16 {offsets = [0, 0], sizes = [8, 192], strides = [1, 1]} : vector<8x256xf32> to vector<8x192xf32>
    %18 = arith.negf %17 : vector<8x192xf32>
    %19 = math.exp %18 : vector<8x192xf32>
    %cst_14 = arith.constant 1.000000e+00 : f32
    %20 = vector.broadcast %cst_14 : f32 to vector<8x192xf32>
    %21 = arith.addf %20, %19 : vector<8x192xf32>
    %22 = arith.divf %20, %21 : vector<8x192xf32>
    %23 = vector.extract_strided_slice %16 {offsets = [0, 192], sizes = [8, 64], strides = [1, 1]} : vector<8x256xf32> to vector<8x64xf32>
    %24 = math.tanh %23 : vector<8x64xf32>
    %25 = vector.extract_strided_slice %22 {offsets = [0, 0], sizes = [8, 64], strides = [1, 1]} : vector<8x192xf32> to vector<8x64xf32>
    %26 = vector.extract_strided_slice %22 {offsets = [0, 64], sizes = [8, 64], strides = [1, 1]} : vector<8x192xf32> to vector<8x64xf32>
    %27 = vector.extract_strided_slice %22 {offsets = [0, 128], sizes = [8, 64], strides = [1, 1]} : vector<8x192xf32> to vector<8x64xf32>
    %28 = arith.mulf %26, %10 : vector<8x64xf32>
    %29 = arith.mulf %25, %24 : vector<8x64xf32>
    %30 = arith.addf %28, %29 : vector<8x64xf32>
    %31 = math.tanh %30 : vector<8x64xf32>
    %32 = arith.mulf %27, %31 : vector<8x64xf32>
    %c1_i32 = arith.constant 1 : i32
    %c8_i32_15 = arith.constant 8 : i32
    %33 = arith.muli %c1_i32, %c8_i32_15 : i32
    %34 = tpu.assume_multiple %33, 8 : i32
    %35 = arith.index_cast %34 : i32 to index
    %c0_16 = arith.constant 0 : index
    %36 = vector.load %arg8[%35, %c0_16] : memref<64x256xf32, #tpu.memory_space<vmem>>, vector<8x256xf32>
    %cst_17 = arith.constant dense<0.000000e+00> : vector<8x256xf32>
    %37 = tpu.matmul %32, %8, %cst_17 {dimension_numbers = #tpu.dot_dimension_numbers<[1], [0], [0], [1], [0, 0, 1, 1], [], []>} : vector<8x64xf32>, vector<64x256xf32>, vector<8x256xf32> -> vector<8x256xf32>
    %38 = arith.addf %36, %37 : vector<8x256xf32>
    %39 = vector.extract_strided_slice %38 {offsets = [0, 0], sizes = [8, 192], strides = [1, 1]} : vector<8x256xf32> to vector<8x192xf32>
    %40 = arith.negf %39 : vector<8x192xf32>
    %41 = math.exp %40 : vector<8x192xf32>
    %cst_18 = arith.constant 1.000000e+00 : f32
    %42 = vector.broadcast %cst_18 : f32 to vector<8x192xf32>
    %43 = arith.addf %42, %41 : vector<8x192xf32>
    %44 = arith.divf %42, %43 : vector<8x192xf32>
    %45 = vector.extract_strided_slice %38 {offsets = [0, 192], sizes = [8, 64], strides = [1, 1]} : vector<8x256xf32> to vector<8x64xf32>
    %46 = math.tanh %45 : vector<8x64xf32>
    %47 = vector.extract_strided_slice %44 {offsets = [0, 0], sizes = [8, 64], strides = [1, 1]} : vector<8x192xf32> to vector<8x64xf32>
    %48 = vector.extract_strided_slice %44 {offsets = [0, 64], sizes = [8, 64], strides = [1, 1]} : vector<8x192xf32> to vector<8x64xf32>
    %49 = vector.extract_strided_slice %44 {offsets = [0, 128], sizes = [8, 64], strides = [1, 1]} : vector<8x192xf32> to vector<8x64xf32>
    %50 = arith.mulf %48, %30 : vector<8x64xf32>
    %51 = arith.mulf %47, %46 : vector<8x64xf32>
    %52 = arith.addf %50, %51 : vector<8x64xf32>
    %53 = math.tanh %52 : vector<8x64xf32>
    %54 = arith.mulf %49, %53 : vector<8x64xf32>
    %c2_i32 = arith.constant 2 : i32
    %c8_i32_19 = arith.constant 8 : i32
    %55 = arith.muli %c2_i32, %c8_i32_19 : i32
    %56 = tpu.assume_multiple %55, 8 : i32
    %57 = arith.index_cast %56 : i32 to index
    %c0_20 = arith.constant 0 : index
    %58 = vector.load %arg8[%57, %c0_20] : memref<64x256xf32, #tpu.memory_space<vmem>>, vector<8x256xf32>
    %cst_21 = arith.constant dense<0.000000e+00> : vector<8x256xf32>
    %59 = tpu.matmul %54, %8, %cst_21 {dimension_numbers = #tpu.dot_dimension_numbers<[1], [0], [0], [1], [0, 0, 1, 1], [], []>} : vector<8x64xf32>, vector<64x256xf32>, vector<8x256xf32> -> vector<8x256xf32>
    %60 = arith.addf %58, %59 : vector<8x256xf32>
    %61 = vector.extract_strided_slice %60 {offsets = [0, 0], sizes = [8, 192], strides = [1, 1]} : vector<8x256xf32> to vector<8x192xf32>
    %62 = arith.negf %61 : vector<8x192xf32>
    %63 = math.exp %62 : vector<8x192xf32>
    %cst_22 = arith.constant 1.000000e+00 : f32
    %64 = vector.broadcast %cst_22 : f32 to vector<8x192xf32>
    %65 = arith.addf %64, %63 : vector<8x192xf32>
    %66 = arith.divf %64, %65 : vector<8x192xf32>
    %67 = vector.extract_strided_slice %60 {offsets = [0, 192], sizes = [8, 64], strides = [1, 1]} : vector<8x256xf32> to vector<8x64xf32>
    %68 = math.tanh %67 : vector<8x64xf32>
    %69 = vector.extract_strided_slice %66 {offsets = [0, 0], sizes = [8, 64], strides = [1, 1]} : vector<8x192xf32> to vector<8x64xf32>
    %70 = vector.extract_strided_slice %66 {offsets = [0, 64], sizes = [8, 64], strides = [1, 1]} : vector<8x192xf32> to vector<8x64xf32>
    %71 = vector.extract_strided_slice %66 {offsets = [0, 128], sizes = [8, 64], strides = [1, 1]} : vector<8x192xf32> to vector<8x64xf32>
    %72 = arith.mulf %70, %52 : vector<8x64xf32>
    %73 = arith.mulf %69, %68 : vector<8x64xf32>
    %74 = arith.addf %72, %73 : vector<8x64xf32>
    %75 = math.tanh %74 : vector<8x64xf32>
    %76 = arith.mulf %71, %75 : vector<8x64xf32>
    %c3_i32 = arith.constant 3 : i32
    %c8_i32_23 = arith.constant 8 : i32
    %77 = arith.muli %c3_i32, %c8_i32_23 : i32
    %78 = tpu.assume_multiple %77, 8 : i32
    %79 = arith.index_cast %78 : i32 to index
    %c0_24 = arith.constant 0 : index
    %80 = vector.load %arg8[%79, %c0_24] : memref<64x256xf32, #tpu.memory_space<vmem>>, vector<8x256xf32>
    %cst_25 = arith.constant dense<0.000000e+00> : vector<8x256xf32>
    %81 = tpu.matmul %76, %8, %cst_25 {dimension_numbers = #tpu.dot_dimension_numbers<[1], [0], [0], [1], [0, 0, 1, 1], [], []>} : vector<8x64xf32>, vector<64x256xf32>, vector<8x256xf32> -> vector<8x256xf32>
    %82 = arith.addf %80, %81 : vector<8x256xf32>
    %83 = vector.extract_strided_slice %82 {offsets = [0, 0], sizes = [8, 192], strides = [1, 1]} : vector<8x256xf32> to vector<8x192xf32>
    %84 = arith.negf %83 : vector<8x192xf32>
    %85 = math.exp %84 : vector<8x192xf32>
    %cst_26 = arith.constant 1.000000e+00 : f32
    %86 = vector.broadcast %cst_26 : f32 to vector<8x192xf32>
    %87 = arith.addf %86, %85 : vector<8x192xf32>
    %88 = arith.divf %86, %87 : vector<8x192xf32>
    %89 = vector.extract_strided_slice %82 {offsets = [0, 192], sizes = [8, 64], strides = [1, 1]} : vector<8x256xf32> to vector<8x64xf32>
    %90 = math.tanh %89 : vector<8x64xf32>
    %91 = vector.extract_strided_slice %88 {offsets = [0, 0], sizes = [8, 64], strides = [1, 1]} : vector<8x192xf32> to vector<8x64xf32>
    %92 = vector.extract_strided_slice %88 {offsets = [0, 64], sizes = [8, 64], strides = [1, 1]} : vector<8x192xf32> to vector<8x64xf32>
    %93 = vector.extract_strided_slice %88 {offsets = [0, 128], sizes = [8, 64], strides = [1, 1]} : vector<8x192xf32> to vector<8x64xf32>
    %94 = arith.mulf %92, %74 : vector<8x64xf32>
    %95 = arith.mulf %91, %90 : vector<8x64xf32>
    %96 = arith.addf %94, %95 : vector<8x64xf32>
    %97 = math.tanh %96 : vector<8x64xf32>
    %98 = arith.mulf %93, %97 : vector<8x64xf32>
    %c4_i32 = arith.constant 4 : i32
    %c8_i32_27 = arith.constant 8 : i32
    %99 = arith.muli %c4_i32, %c8_i32_27 : i32
    %100 = tpu.assume_multiple %99, 8 : i32
    %101 = arith.index_cast %100 : i32 to index
    %c0_28 = arith.constant 0 : index
    %102 = vector.load %arg8[%101, %c0_28] : memref<64x256xf32, #tpu.memory_space<vmem>>, vector<8x256xf32>
    %cst_29 = arith.constant dense<0.000000e+00> : vector<8x256xf32>
    %103 = tpu.matmul %98, %8, %cst_29 {dimension_numbers = #tpu.dot_dimension_numbers<[1], [0], [0], [1], [0, 0, 1, 1], [], []>} : vector<8x64xf32>, vector<64x256xf32>, vector<8x256xf32> -> vector<8x256xf32>
    %104 = arith.addf %102, %103 : vector<8x256xf32>
    %105 = vector.extract_strided_slice %104 {offsets = [0, 0], sizes = [8, 192], strides = [1, 1]} : vector<8x256xf32> to vector<8x192xf32>
    %106 = arith.negf %105 : vector<8x192xf32>
    %107 = math.exp %106 : vector<8x192xf32>
    %cst_30 = arith.constant 1.000000e+00 : f32
    %108 = vector.broadcast %cst_30 : f32 to vector<8x192xf32>
    %109 = arith.addf %108, %107 : vector<8x192xf32>
    %110 = arith.divf %108, %109 : vector<8x192xf32>
    %111 = vector.extract_strided_slice %104 {offsets = [0, 192], sizes = [8, 64], strides = [1, 1]} : vector<8x256xf32> to vector<8x64xf32>
    %112 = math.tanh %111 : vector<8x64xf32>
    %113 = vector.extract_strided_slice %110 {offsets = [0, 0], sizes = [8, 64], strides = [1, 1]} : vector<8x192xf32> to vector<8x64xf32>
    %114 = vector.extract_strided_slice %110 {offsets = [0, 64], sizes = [8, 64], strides = [1, 1]} : vector<8x192xf32> to vector<8x64xf32>
    %115 = vector.extract_strided_slice %110 {offsets = [0, 128], sizes = [8, 64], strides = [1, 1]} : vector<8x192xf32> to vector<8x64xf32>
    %116 = arith.mulf %114, %96 : vector<8x64xf32>
    %117 = arith.mulf %113, %112 : vector<8x64xf32>
    %118 = arith.addf %116, %117 : vector<8x64xf32>
    %119 = math.tanh %118 : vector<8x64xf32>
    %120 = arith.mulf %115, %119 : vector<8x64xf32>
    %c5_i32 = arith.constant 5 : i32
    %c8_i32_31 = arith.constant 8 : i32
    %121 = arith.muli %c5_i32, %c8_i32_31 : i32
    %122 = tpu.assume_multiple %121, 8 : i32
    %123 = arith.index_cast %122 : i32 to index
    %c0_32 = arith.constant 0 : index
    %124 = vector.load %arg8[%123, %c0_32] : memref<64x256xf32, #tpu.memory_space<vmem>>, vector<8x256xf32>
    %cst_33 = arith.constant dense<0.000000e+00> : vector<8x256xf32>
    %125 = tpu.matmul %120, %8, %cst_33 {dimension_numbers = #tpu.dot_dimension_numbers<[1], [0], [0], [1], [0, 0, 1, 1], [], []>} : vector<8x64xf32>, vector<64x256xf32>, vector<8x256xf32> -> vector<8x256xf32>
    %126 = arith.addf %124, %125 : vector<8x256xf32>
    %127 = vector.extract_strided_slice %126 {offsets = [0, 0], sizes = [8, 192], strides = [1, 1]} : vector<8x256xf32> to vector<8x192xf32>
    %128 = arith.negf %127 : vector<8x192xf32>
    %129 = math.exp %128 : vector<8x192xf32>
    %cst_34 = arith.constant 1.000000e+00 : f32
    %130 = vector.broadcast %cst_34 : f32 to vector<8x192xf32>
    %131 = arith.addf %130, %129 : vector<8x192xf32>
    %132 = arith.divf %130, %131 : vector<8x192xf32>
    %133 = vector.extract_strided_slice %126 {offsets = [0, 192], sizes = [8, 64], strides = [1, 1]} : vector<8x256xf32> to vector<8x64xf32>
    %134 = math.tanh %133 : vector<8x64xf32>
    %135 = vector.extract_strided_slice %132 {offsets = [0, 0], sizes = [8, 64], strides = [1, 1]} : vector<8x192xf32> to vector<8x64xf32>
    %136 = vector.extract_strided_slice %132 {offsets = [0, 64], sizes = [8, 64], strides = [1, 1]} : vector<8x192xf32> to vector<8x64xf32>
    %137 = vector.extract_strided_slice %132 {offsets = [0, 128], sizes = [8, 64], strides = [1, 1]} : vector<8x192xf32> to vector<8x64xf32>
    %138 = arith.mulf %136, %118 : vector<8x64xf32>
    %139 = arith.mulf %135, %134 : vector<8x64xf32>
    %140 = arith.addf %138, %139 : vector<8x64xf32>
    %141 = math.tanh %140 : vector<8x64xf32>
    %142 = arith.mulf %137, %141 : vector<8x64xf32>
    %c6_i32 = arith.constant 6 : i32
    %c8_i32_35 = arith.constant 8 : i32
    %143 = arith.muli %c6_i32, %c8_i32_35 : i32
    %144 = tpu.assume_multiple %143, 8 : i32
    %145 = arith.index_cast %144 : i32 to index
    %c0_36 = arith.constant 0 : index
    %146 = vector.load %arg8[%145, %c0_36] : memref<64x256xf32, #tpu.memory_space<vmem>>, vector<8x256xf32>
    %cst_37 = arith.constant dense<0.000000e+00> : vector<8x256xf32>
    %147 = tpu.matmul %142, %8, %cst_37 {dimension_numbers = #tpu.dot_dimension_numbers<[1], [0], [0], [1], [0, 0, 1, 1], [], []>} : vector<8x64xf32>, vector<64x256xf32>, vector<8x256xf32> -> vector<8x256xf32>
    %148 = arith.addf %146, %147 : vector<8x256xf32>
    %149 = vector.extract_strided_slice %148 {offsets = [0, 0], sizes = [8, 192], strides = [1, 1]} : vector<8x256xf32> to vector<8x192xf32>
    %150 = arith.negf %149 : vector<8x192xf32>
    %151 = math.exp %150 : vector<8x192xf32>
    %cst_38 = arith.constant 1.000000e+00 : f32
    %152 = vector.broadcast %cst_38 : f32 to vector<8x192xf32>
    %153 = arith.addf %152, %151 : vector<8x192xf32>
    %154 = arith.divf %152, %153 : vector<8x192xf32>
    %155 = vector.extract_strided_slice %148 {offsets = [0, 192], sizes = [8, 64], strides = [1, 1]} : vector<8x256xf32> to vector<8x64xf32>
    %156 = math.tanh %155 : vector<8x64xf32>
    %157 = vector.extract_strided_slice %154 {offsets = [0, 0], sizes = [8, 64], strides = [1, 1]} : vector<8x192xf32> to vector<8x64xf32>
    %158 = vector.extract_strided_slice %154 {offsets = [0, 64], sizes = [8, 64], strides = [1, 1]} : vector<8x192xf32> to vector<8x64xf32>
    %159 = vector.extract_strided_slice %154 {offsets = [0, 128], sizes = [8, 64], strides = [1, 1]} : vector<8x192xf32> to vector<8x64xf32>
    %160 = arith.mulf %158, %140 : vector<8x64xf32>
    %161 = arith.mulf %157, %156 : vector<8x64xf32>
    %162 = arith.addf %160, %161 : vector<8x64xf32>
    %163 = math.tanh %162 : vector<8x64xf32>
    %164 = arith.mulf %159, %163 : vector<8x64xf32>
    %c7_i32 = arith.constant 7 : i32
    %c8_i32_39 = arith.constant 8 : i32
    %165 = arith.muli %c7_i32, %c8_i32_39 : i32
    %166 = tpu.assume_multiple %165, 8 : i32
    %167 = arith.index_cast %166 : i32 to index
    %c0_40 = arith.constant 0 : index
    %168 = vector.load %arg8[%167, %c0_40] : memref<64x256xf32, #tpu.memory_space<vmem>>, vector<8x256xf32>
    %cst_41 = arith.constant dense<0.000000e+00> : vector<8x256xf32>
    %169 = tpu.matmul %164, %8, %cst_41 {dimension_numbers = #tpu.dot_dimension_numbers<[1], [0], [0], [1], [0, 0, 1, 1], [], []>} : vector<8x64xf32>, vector<64x256xf32>, vector<8x256xf32> -> vector<8x256xf32>
    %170 = arith.addf %168, %169 : vector<8x256xf32>
    %171 = vector.extract_strided_slice %170 {offsets = [0, 0], sizes = [8, 192], strides = [1, 1]} : vector<8x256xf32> to vector<8x192xf32>
    %172 = arith.negf %171 : vector<8x192xf32>
    %173 = math.exp %172 : vector<8x192xf32>
    %cst_42 = arith.constant 1.000000e+00 : f32
    %174 = vector.broadcast %cst_42 : f32 to vector<8x192xf32>
    %175 = arith.addf %174, %173 : vector<8x192xf32>
    %176 = arith.divf %174, %175 : vector<8x192xf32>
    %177 = vector.extract_strided_slice %170 {offsets = [0, 192], sizes = [8, 64], strides = [1, 1]} : vector<8x256xf32> to vector<8x64xf32>
    %178 = math.tanh %177 : vector<8x64xf32>
    %179 = vector.extract_strided_slice %176 {offsets = [0, 0], sizes = [8, 64], strides = [1, 1]} : vector<8x192xf32> to vector<8x64xf32>
    %180 = vector.extract_strided_slice %176 {offsets = [0, 64], sizes = [8, 64], strides = [1, 1]} : vector<8x192xf32> to vector<8x64xf32>
    %181 = vector.extract_strided_slice %176 {offsets = [0, 128], sizes = [8, 64], strides = [1, 1]} : vector<8x192xf32> to vector<8x64xf32>
    %182 = arith.mulf %180, %162 : vector<8x64xf32>
    %183 = arith.mulf %179, %178 : vector<8x64xf32>
    %184 = arith.addf %182, %183 : vector<8x64xf32>
    %185 = math.tanh %184 : vector<8x64xf32>
    %186 = arith.mulf %181, %185 : vector<8x64xf32>
    %c8_i32_43 = arith.constant 8 : i32
    %c0_44 = arith.constant 0 : index
    %c0_45 = arith.constant 0 : index
    %187 = vector.load %arg5[%c0_44, %c0_45] : memref<64x128xf32, #tpu.memory_space<vmem>>, vector<64x128xf32>
    %cst_46 = arith.constant dense<0.000000e+00> : vector<8x128xf32>
    %188 = tpu.matmul %186, %187, %cst_46 {dimension_numbers = #tpu.dot_dimension_numbers<[1], [0], [0], [1], [0, 0, 1, 1], [], []>} : vector<8x64xf32>, vector<64x128xf32>, vector<8x128xf32> -> vector<8x128xf32>
    %c0_47 = arith.constant 0 : index
    %c0_48 = arith.constant 0 : index
    %189 = vector.load %arg6[%c0_47, %c0_48] : memref<1x128xf32, #tpu.memory_space<vmem>>, vector<1x128xf32>
    %190 = vector.broadcast %189 : vector<1x128xf32> to vector<8x128xf32>
    %191 = arith.addf %188, %190 : vector<8x128xf32>
    %c0_49 = arith.constant 0 : index
    %c0_50 = arith.constant 0 : index
    %192 = vector.load %arg7[%c0_49, %c0_50] : memref<8x128xf32, #tpu.memory_space<vmem>>, vector<8x128xf32>
    tpu.vector_store %arg7[%c0_49, %c0_50], %191 {strides = array<i32>} : memref<8x128xf32, #tpu.memory_space<vmem>>, vector<8x128xf32>,
    return
  }
  func.func @transform_0(%arg0: i32) -> (i32, i32, i32) {
    %c0_i32 = arith.constant 0 : i32
    %c0_i32_0 = arith.constant 0 : i32
    %c0_i32_1 = arith.constant 0 : i32
    return %arg0, %c0_i32, %c0_i32_0 : i32, i32, i32
  }
  func.func @transform_1(%arg0: i32) -> (i32, i32) {
    %c0_i32 = arith.constant 0 : i32
    %c0_i32_0 = arith.constant 0 : i32
    %c0_i32_1 = arith.constant 0 : i32
    return %c0_i32, %c0_i32_0 : i32, i32
  }
  func.func @transform_2(%arg0: i32) -> (i32, i32) {
    %c0_i32 = arith.constant 0 : i32
    %c0_i32_0 = arith.constant 0 : i32
    %c0_i32_1 = arith.constant 0 : i32
    return %c0_i32, %c0_i32_0 : i32, i32
  }
  func.func @transform_3(%arg0: i32) -> (i32, i32) {
    %c0_i32 = arith.constant 0 : i32
    %c0_i32_0 = arith.constant 0 : i32
    %c0_i32_1 = arith.constant 0 : i32
    return %c0_i32, %c0_i32_0 : i32, i32
  }
  func.func @transform_4(%arg0: i32) -> (i32, i32) {
    %c0_i32 = arith.constant 0 : i32
    %c0_i32_0 = arith.constant 0 : i32
    %c0_i32_1 = arith.constant 0 : i32
    return %c0_i32, %c0_i32_0 : i32, i32
  }
  func.func @transform_5(%arg0: i32) -> (i32, i32) {
    %c0_i32 = arith.constant 0 : i32
    %c0_i32_0 = arith.constant 0 : i32
    %c0_i32_1 = arith.constant 0 : i32
    return %c0_i32, %c0_i32_0 : i32, i32
  }
  func.func @transform_6(%arg0: i32) -> (i32, i32) {
    %c0_i32 = arith.constant 0 : i32
    %c0_i32_0 = arith.constant 0 : i32
    return %arg0, %c0_i32 : i32, i32
  }
}

</mosaic_0001>

<llo_original>
// kernel: intent_classifier_forward.1
$region0: #{intent_classifier_forward.1}
  #allocation0 [shape = 'u32[]', space=smem, size = 0x4, offset = 0x4, fixed_abs, tag = 'smem constant byte address 0x4 - core index']
  #allocation1 [shape = 'u32[144,128]{1,0:T(1,128)}', space=vmem, size = 0x12000, scoped, tag = 'internal scratch']
  #allocation2 [shape = 'f32[64,256]{1,0:T(8,128)}', space=vmem, size = 0x10000, scoped, tag = 'scratch operand']
  %s0 = inlined_call_operand.vmem [shape: f32[1,64,64], index: 0, kind: input, shape index: {}]
  %s1 = inlined_call_operand.vmem [shape: f32[64,256], index: 1, kind: input, shape index: {}]
  %s2 = inlined_call_operand.vmem [shape: f32[64,256], index: 2, kind: input, shape index: {}]
  %s3 = inlined_call_operand.vmem [shape: f32[1,256], index: 3, kind: input, shape index: {}]
  %s4 = inlined_call_operand.vmem [shape: f32[64,128], index: 4, kind: input, shape index: {}]
  %s5 = inlined_call_operand.vmem [shape: f32[1,128], index: 5, kind: input, shape index: {}]
  %s6 = inlined_call_operand.vmem [shape: f32[8,128], index: 6, kind: output, shape index: {}]
  %s7 = sld [smem:[#allocation0]]
  $region34: #{intent_classifier_forward.1} parent=0
    _
  %s9 = ssub.s32 1, %s7
  %s10 = scalar_select 0, %s9, %s7
  // Predicated region
  $region2: #{intent_classifier_forward.1} parent=0 // pred_check
    _
  $region3: #{intent_classifier_forward.1} parent=0 // pred_check_branch
    %12 = sbr.rel (0) target = $region5
  $region4: #{intent_classifier_forward.1} parent=0 // pred_region
    _
  $region5: #{intent_classifier_forward.1} parent=0 // pred_fallthru
    _
  // Predicated region
  $region6: #{intent_classifier_forward.1} parent=0 // pred_check
    _
  $region7: #{intent_classifier_forward.1} parent=0 // pred_check_branch
    %14 = sbr.rel (0) target = $region9
  $region8: #{intent_classifier_forward.1} parent=0 // pred_region
    _
  $region9: #{intent_classifier_forward.1} parent=0 // pred_fallthru
    _
  // Predicated region
  $region10: #{intent_classifier_forward.1} parent=0 // pred_check
    _
  $region11: #{intent_classifier_forward.1} parent=0 // pred_check_branch
    %16 = sbr.rel (0) target = $region13
  $region12: #{intent_classifier_forward.1} parent=0 // pred_region
    _
  $region13: #{intent_classifier_forward.1} parent=0 // pred_fallthru
    _
  // Predicated region
  $region14: #{intent_classifier_forward.1} parent=0 // pred_check
    _
  $region15: #{intent_classifier_forward.1} parent=0 // pred_check_branch
    %18 = sbr.rel (0) target = $region17
  $region16: #{intent_classifier_forward.1} parent=0 // pred_region
    _
  $region17: #{intent_classifier_forward.1} parent=0 // pred_fallthru
    _
  // Predicated region
  $region18: #{intent_classifier_forward.1} parent=0 // pred_check
    _
  $region19: #{intent_classifier_forward.1} parent=0 // pred_check_branch
    %20 = sbr.rel (0) target = $region21
  $region20: #{intent_classifier_forward.1} parent=0 // pred_region
    _
  $region21: #{intent_classifier_forward.1} parent=0 // pred_fallthru
    _
  // Predicated region
  $region22: #{intent_classifier_forward.1} parent=0 // pred_check
    _
  $region23: #{intent_classifier_forward.1} parent=0 // pred_check_branch
    %22 = sbr.rel (0) target = $region25
  $region24: #{intent_classifier_forward.1} parent=0 // pred_region
    _
  $region25: #{intent_classifier_forward.1} parent=0 // pred_fallthru
    _
  %v23 = vld [vmem:[%s0] sm:$0xff]
  %v24 = vld [vmem:[%s0 + $0x8] sm:$0xff]
  %v25 = vld [vmem:[%s0 + $0x10] sm:$0xff]
  %v26 = vld [vmem:[%s0 + $0x18] sm:$0xff]
  %v27 = vld [vmem:[%s0 + $0x20] sm:$0xff]
  %v28 = vld [vmem:[%s0 + $0x28] sm:$0xff]
  %v29 = vld [vmem:[%s0 + $0x30] sm:$0xff]
  %v30 = vld [vmem:[%s0 + $0x38] sm:$0xff]
  %v31 = vld [vmem:[%s1] sm:$0xff]
  %v32 = vld [vmem:[%s1 + $0x8] sm:$0xff]
  %v33 = vld [vmem:[%s1 + $0x10] sm:$0xff]
  %v34 = vld [vmem:[%s1 + $0x18] sm:$0xff]
  %v35 = vld [vmem:[%s1 + $0x20] sm:$0xff]
  %v36 = vld [vmem:[%s1 + $0x28] sm:$0xff]
  %v37 = vld [vmem:[%s1 + $0x30] sm:$0xff]
  %v38 = vld [vmem:[%s1 + $0x38] sm:$0xff]
  %v39 = vld [vmem:[%s1 + $0x40] sm:$0xff]
  %v40 = vld [vmem:[%s1 + $0x48] sm:$0xff]
  %v41 = vld [vmem:[%s1 + $0x50] sm:$0xff]
  %v42 = vld [vmem:[%s1 + $0x58] sm:$0xff]
  %v43 = vld [vmem:[%s1 + $0x60] sm:$0xff]
  %v44 = vld [vmem:[%s1 + $0x68] sm:$0xff]
  %v45 = vld [vmem:[%s1 + $0x70] sm:$0xff]
  %v46 = vld [vmem:[%s1 + $0x78] sm:$0xff]
  %v47 = vld [vmem:[%s3] sm:$0x3]
  %v49 = vlaneseq
  %v50 = vshrl.u32 %v49, 7
  %v51 = vsub.s32 0, %v50
  %v52 = vrot.slane %v47, %v51
  %v53 = vlaneseq
  %v54 = vshrl.u32 %v53, 7
  %v55 = vsub.s32 1, %v54
  %v56 = vrot.slane %v47, %v55
  %vm59 = vcmask 523264
  %v61 = vsel %vm59, %v23, 0
  %v64 = vsel %vm59, %v24, 0
  %v67 = vsel %vm59, %v25, 0
  %v70 = vsel %vm59, %v26, 0
  %v73 = vsel %vm59, %v27, 0
  %v76 = vsel %vm59, %v28, 0
  %v79 = vsel %vm59, %v29, 0
  %v82 = vsel %vm59, %v30, 0
  %84 = vmatprep.subr.mxu0 0.0
  %85 = vmatpush1.msra.mxu0 0.0
  %86 = vmatprep.subr.mxu0 0.0
  %87 = vmatpush1.msra.mxu0 0.0
  %88 = vmatprep.subr.mxu0 0.0
  %89 = vmatpush1.msra.mxu0 0.0
  %90 = vmatprep.subr.mxu0 0.0
  %91 = vmatpush1.msra.mxu0 0.0
  %92 = vmatprep.subr.mxu0 0.0
  %93 = vmatpush1.msra.mxu0 0.0
  %94 = vmatprep.subr.mxu0 0.0
  %95 = vmatpush1.msra.mxu0 0.0
  %96 = vmatprep.subr.mxu0 0.0
  %97 = vmatpush1.msra.mxu0 0.0
  %98 = vmatprep.subr.mxu0 0.0
  %99 = vmatpush1.msra.mxu0 0.0
  %100 = vmatprep.subr.mxu0 %v46
  %101 = vmatpush1.msra.mxu0 %v45
  %102 = vmatprep.subr.mxu0 %v44
  %103 = vmatpush1.msra.mxu0 %v43
  %104 = vmatprep.subr.mxu0 %v42
  %105 = vmatpush1.msra.mxu0 %v41
  %106 = vmatprep.subr.mxu0 %v40
  %107 = vmatpush1.msra.mxu0 %v39
  %108 = vmatprep.subr.mxu0 %v38
  %109 = vmatpush1.msra.mxu0 %v37
  %110 = vmatprep.subr.mxu0 %v36
  %111 = vmatpush1.msra.mxu0 %v35
  %112 = vmatprep.subr.mxu0 %v34
  %113 = vmatpush1.msra.mxu0 %v33
  %114 = vmatprep.subr.mxu0 %v32
  %115 = vmatpush1.msra.mxu0 %v31
  %116 = vmatprep.subr.mxu0 0.0
  %117 = vmatpush2.msra.mxu0 0.0
  %118 = vmatprep.subr.mxu0 0.0
  %119 = vmatpush2.msra.mxu0 0.0
  %120 = vmatprep.subr.mxu0 0.0
  %121 = vmatpush2.msra.mxu0 0.0
  %122 = vmatprep.subr.mxu0 0.0
  %123 = vmatpush2.msra.mxu0 0.0
  %124 = vmatprep.subr.mxu0 0.0
  %125 = vmatpush2.msra.mxu0 0.0
  %126 = vmatprep.subr.mxu0 0.0
  %127 = vmatpush2.msra.mxu0 0.0
  %128 = vmatprep.subr.mxu0 0.0
  %129 = vmatpush2.msra.mxu0 0.0
  %130 = vmatprep.subr.mxu0 0.0
  %131 = vmatpush2.msra.mxu0 0.0
  %132 = vmatprep.subr.mxu0 0.0
  %133 = vmatpush2.msra.mxu0 0.0
  %134 = vmatprep.subr.mxu0 0.0
  %135 = vmatpush2.msra.mxu0 0.0
  %136 = vmatprep.subr.mxu0 0.0
  %137 = vmatpush2.msra.mxu0 0.0
  %138 = vmatprep.subr.mxu0 0.0
  %139 = vmatpush2.msra.mxu0 0.0
  %140 = vmatprep.subr.mxu0 0.0
  %141 = vmatpush2.msra.mxu0 0.0
  %142 = vmatprep.subr.mxu0 0.0
  %143 = vmatpush2.msra.mxu0 0.0
  %144 = vmatprep.subr.mxu0 0.0
  %145 = vmatpush2.msra.mxu0 0.0
  %146 = vmatprep.subr.mxu0 0.0
  %147 = vmatpush2.msra.mxu0 0.0
  %148 = vmatprep.mubr.f32.mxu0 0.0
  %149 = vmatmul.mubr.f32.gmra.mxu0 %v61
  %v150 = vpop.f32.mrf.mxu0
  %v151 = vadd.f32 %v52, %v150
  %v152 = vpop.f32.mrf.mxu0
  %v153 = vadd.f32 %v56, %v152
  %154 = vmatprep.mubr.f32.mxu0 0.0
  %155 = vmatmul.mubr.f32.gmra.mxu0 %v64
  %v156 = vpop.f32.mrf.mxu0
  %v157 = vadd.f32 %v52, %v156
  %v158 = vpop.f32.mrf.mxu0
  %v159 = vadd.f32 %v56, %v158
  %160 = vmatprep.mubr.f32.mxu0 0.0
  %161 = vmatmul.mubr.f32.gmra.mxu0 %v67
  %v162 = vpop.f32.mrf.mxu0
  %v163 = vadd.f32 %v52, %v162
  %v164 = vpop.f32.mrf.mxu0
  %v165 = vadd.f32 %v56, %v164
  %166 = vmatprep.mubr.f32.mxu0 0.0
  %167 = vmatmul.mubr.f32.gmra.mxu0 %v70
  %v168 = vpop.f32.mrf.mxu0
  %v169 = vadd.f32 %v52, %v168
  %v170 = vpop.f32.mrf.mxu0
  %v171 = vadd.f32 %v56, %v170
  %172 = vmatprep.mubr.f32.mxu0 0.0
  %173 = vmatmul.mubr.f32.gmra.mxu0 %v73
  %v174 = vpop.f32.mrf.mxu0
  %v175 = vadd.f32 %v52, %v174
  %v176 = vpop.f32.mrf.mxu0
  %v177 = vadd.f32 %v56, %v176
  %178 = vmatprep.mubr.f32.mxu0 0.0
  %179 = vmatmul.mubr.f32.gmra.mxu0 %v76
  %v180 = vpop.f32.mrf.mxu0
  %v181 = vadd.f32 %v52, %v180
  %v182 = vpop.f32.mrf.mxu0
  %v183 = vadd.f32 %v56, %v182
  %184 = vmatprep.mubr.f32.mxu0 0.0
  %185 = vmatmul.mubr.f32.gmra.mxu0 %v79
  %v186 = vpop.f32.mrf.mxu0
  %v187 = vadd.f32 %v52, %v186
  %v188 = vpop.f32.mrf.mxu0
  %v189 = vadd.f32 %v56, %v188
  %190 = vmatprep.mubr.f32.mxu0 0.0
  %191 = vmatmul.mubr.f32.gmra.mxu0 %v82
  %v192 = vpop.f32.mrf.mxu0
  %v193 = vadd.f32 %v52, %v192
  %v194 = vpop.f32.mrf.mxu0
  %v195 = vadd.f32 %v56, %v194
  %196 = vdwg.mxu0
  %197 = vst [vmem:[#allocation2] sm:$0xff] %v151
  %198 = vst [vmem:[#allocation2 + $0x8] sm:$0xff] %v153
  %199 = vst [vmem:[#allocation2 + $0x10] sm:$0xff] %v157
  %200 = vst [vmem:[#allocation2 + $0x18] sm:$0xff] %v159
  %201 = vst [vmem:[#allocation2 + $0x20] sm:$0xff] %v163
  %202 = vst [vmem:[#allocation2 + $0x28] sm:$0xff] %v165
  %203 = vst [vmem:[#allocation2 + $0x30] sm:$0xff] %v169
  %204 = vst [vmem:[#allocation2 + $0x38] sm:$0xff] %v171
  %205 = vst [vmem:[#allocation2 + $0x40] sm:$0xff] %v175
  %206 = vst [vmem:[#allocation2 + $0x48] sm:$0xff] %v177
  %207 = vst [vmem:[#allocation2 + $0x50] sm:$0xff] %v181
  %208 = vst [vmem:[#allocation2 + $0x58] sm:$0xff] %v183
  %209 = vst [vmem:[#allocation2 + $0x60] sm:$0xff] %v187
  %210 = vst [vmem:[#allocation2 + $0x68] sm:$0xff] %v189
  %211 = vst [vmem:[#allocation2 + $0x70] sm:$0xff] %v193
  %212 = vst [vmem:[#allocation2 + $0x78] sm:$0xff] %v195
  %v213 = vld [vmem:[%s2] sm:$0xff]
  %v214 = vld [vmem:[%s2 + $0x8] sm:$0xff]
  %v215 = vld [vmem:[%s2 + $0x10] sm:$0xff]
  %v216 = vld [vmem:[%s2 + $0x18] sm:$0xff]
  %v217 = vld [vmem:[%s2 + $0x20] sm:$0xff]
  %v218 = vld [vmem:[%s2 + $0x28] sm:$0xff]
  %v219 = vld [vmem:[%s2 + $0x30] sm:$0xff]
  %v220 = vld [vmem:[%s2 + $0x38] sm:$0xff]
  %v221 = vld [vmem:[%s2 + $0x40] sm:$0xff]
  %v222 = vld [vmem:[%s2 + $0x48] sm:$0xff]
  %v223 = vld [vmem:[%s2 + $0x50] sm:$0xff]
  %v224 = vld [vmem:[%s2 + $0x58] sm:$0xff]
  %v225 = vld [vmem:[%s2 + $0x60] sm:$0xff]
  %v226 = vld [vmem:[%s2 + $0x68] sm:$0xff]
  %v227 = vld [vmem:[%s2 + $0x70] sm:$0xff]
  %v228 = vld [vmem:[%s2 + $0x78] sm:$0xff]
  %s229 = smul.u32 0, 2
  %s230 = smul.addr %s229, 8
  %s231 = scalar_lea.vmem [#allocation2], %s230
  %v232 = vld [vmem:[%s231] sm:$0xff]
  %v233 = vld [vmem:[%s231 + $0x8] sm:$0xff]
  %v235 = vsel %vm59, 0.0, 0
  %237 = vmatprep.subr.mxu0 0.0
  %238 = vmatpush1.msra.mxu0 0.0
  %239 = vmatprep.subr.mxu0 0.0
  %240 = vmatpush1.msra.mxu0 0.0
  %241 = vmatprep.subr.mxu0 0.0
  %242 = vmatpush1.msra.mxu0 0.0
  %243 = vmatprep.subr.mxu0 0.0
  %244 = vmatpush1.msra.mxu0 0.0
  %245 = vmatprep.subr.mxu0 0.0
  %246 = vmatpush1.msra.mxu0 0.0
  %247 = vmatprep.subr.mxu0 0.0
  %248 = vmatpush1.msra.mxu0 0.0
  %249 = vmatprep.subr.mxu0 0.0
  %250 = vmatpush1.msra.mxu0 0.0
  %251 = vmatprep.subr.mxu0 0.0
  %252 = vmatpush1.msra.mxu0 0.0
  %253 = vmatprep.subr.mxu0 %v228
  %254 = vmatpush1.msra.mxu0 %v227
  %255 = vmatprep.subr.mxu0 %v226
  %256 = vmatpush1.msra.mxu0 %v225
  %257 = vmatprep.subr.mxu0 %v224
  %258 = vmatpush1.msra.mxu0 %v223
  %259 = vmatprep.subr.mxu0 %v222
  %260 = vmatpush1.msra.mxu0 %v221
  %261 = vmatprep.subr.mxu0 %v220
  %262 = vmatpush1.msra.mxu0 %v219
  %263 = vmatprep.subr.mxu0 %v218
  %264 = vmatpush1.msra.mxu0 %v217
  %265 = vmatprep.subr.mxu0 %v216
  %266 = vmatpush1.msra.mxu0 %v215
  %267 = vmatprep.subr.mxu0 %v214
  %268 = vmatpush1.msra.mxu0 %v213
  %269 = vmatprep.subr.mxu0 0.0
  %270 = vmatpush2.msra.mxu0 0.0
  %271 = vmatprep.subr.mxu0 0.0
  %272 = vmatpush2.msra.mxu0 0.0
  %273 = vmatprep.subr.mxu0 0.0
  %274 = vmatpush2.msra.mxu0 0.0
  %275 = vmatprep.subr.mxu0 0.0
  %276 = vmatpush2.msra.mxu0 0.0
  %277 = vmatprep.subr.mxu0 0.0
  %278 = vmatpush2.msra.mxu0 0.0
  %279 = vmatprep.subr.mxu0 0.0
  %280 = vmatpush2.msra.mxu0 0.0
  %281 = vmatprep.subr.mxu0 0.0
  %282 = vmatpush2.msra.mxu0 0.0
  %283 = vmatprep.subr.mxu0 0.0
  %284 = vmatpush2.msra.mxu0 0.0
  %285 = vmatprep.subr.mxu0 0.0
  %286 = vmatpush2.msra.mxu0 0.0
  %287 = vmatprep.subr.mxu0 0.0
  %288 = vmatpush2.msra.mxu0 0.0
  %289 = vmatprep.subr.mxu0 0.0
  %290 = vmatpush2.msra.mxu0 0.0
  %291 = vmatprep.subr.mxu0 0.0
  %292 = vmatpush2.msra.mxu0 0.0
  %293 = vmatprep.subr.mxu0 0.0
  %294 = vmatpush2.msra.mxu0 0.0
  %295 = vmatprep.subr.mxu0 0.0
  %296 = vmatpush2.msra.mxu0 0.0
  %297 = vmatprep.subr.mxu0 0.0
  %298 = vmatpush2.msra.mxu0 0.0
  %299 = vmatprep.subr.mxu0 0.0
  %300 = vmatpush2.msra.mxu0 0.0
  %301 = vmatprep.mubr.f32.mxu0 0.0
  %302 = vmatmul.mubr.f32.gmra.mxu0 %v235
  %v303 = vpop.f32.mrf.mxu0
  %v304 = vadd.f32 0.0, %v303
  %v305 = vpop.f32.mrf.mxu0
  %v306 = vadd.f32 0.0, %v305
  %307 = vdwg.mxu0
  %v308 = vadd.f32 %v232, %v304
  %v309 = vadd.f32 %v233, %v306
  %v310 = vxor.u32 %v308, 2147483648
  %v311 = vxor.u32 %v309, 2147483648
  %v312 = vmul.f32 %v310, 1.442695
  %v313 = vpow.pop %v312
  %v314 = vmul.f32 %v311, 1.442695
  %v315 = vpow.pop %v314
  %v316 = vadd.f32 %v313, 1.0
  %v317 = vadd.f32 %v315, 1.0
  %v318 = vrcp.pop %v316
  %v319 = vmul.f32 1.0, %v318
  %v320 = vrcp.pop %v317
  %v321 = vmul.f32 1.0, %v320
  %v322 = vtanh.pop %v309
  %v323 = vmul.f32 %v319, 0.0
  %325 = vrot.lane.b32.xlu0 %v322, 64
  %v326 = vpop.permute.xlu0 %325
  %v328 = vmul.f32 %v319, %v326
  %330 = vrot.lane.b32.xlu0 %v328, 64
  %v331 = vpop.permute.xlu0 %330
  %v333 = vadd.f32 %v323, %v331
  %v334 = vtanh.pop %v333
  %336 = vrot.lane.b32.xlu0 %v334, 64
  %v337 = vpop.permute.xlu0 %336
  %v339 = vmul.f32 %v321, %v337
  %s340 = smul.u32 1, 2
  %s341 = smul.addr %s340, 8
  %s342 = scalar_lea.vmem [#allocation2], %s341
  %v343 = vld [vmem:[%s342] sm:$0xff]
  %v344 = vld [vmem:[%s342 + $0x8] sm:$0xff]
  %v346 = vsel %vm59, %v339, 0
  %348 = vmatprep.subr.mxu0 0.0
  %349 = vmatpush1.msra.mxu0 0.0
  %350 = vmatprep.subr.mxu0 0.0
  %351 = vmatpush1.msra.mxu0 0.0
  %352 = vmatprep.subr.mxu0 0.0
  %353 = vmatpush1.msra.mxu0 0.0
  %354 = vmatprep.subr.mxu0 0.0
  %355 = vmatpush1.msra.mxu0 0.0
  %356 = vmatprep.subr.mxu0 0.0
  %357 = vmatpush1.msra.mxu0 0.0
  %358 = vmatprep.subr.mxu0 0.0
  %359 = vmatpush1.msra.mxu0 0.0
  %360 = vmatprep.subr.mxu0 0.0
  %361 = vmatpush1.msra.mxu0 0.0
  %362 = vmatprep.subr.mxu0 0.0
  %363 = vmatpush1.msra.mxu0 0.0
  %364 = vmatprep.subr.mxu0 %v228
  %365 = vmatpush1.msra.mxu0 %v227
  %366 = vmatprep.subr.mxu0 %v226
  %367 = vmatpush1.msra.mxu0 %v225
  %368 = vmatprep.subr.mxu0 %v224
  %369 = vmatpush1.msra.mxu0 %v223
  %370 = vmatprep.subr.mxu0 %v222
  %371 = vmatpush1.msra.mxu0 %v221
  %372 = vmatprep.subr.mxu0 %v220
  %373 = vmatpush1.msra.mxu0 %v219
  %374 = vmatprep.subr.mxu0 %v218
  %375 = vmatpush1.msra.mxu0 %v217
  %376 = vmatprep.subr.mxu0 %v216
  %377 = vmatpush1.msra.mxu0 %v215
  %378 = vmatprep.subr.mxu0 %v214
  %379 = vmatpush1.msra.mxu0 %v213
  %380 = vmatprep.subr.mxu0 0.0
  %381 = vmatpush2.msra.mxu0 0.0
  %382 = vmatprep.subr.mxu0 0.0
  %383 = vmatpush2.msra.mxu0 0.0
  %384 = vmatprep.subr.mxu0 0.0
  %385 = vmatpush2.msra.mxu0 0.0
  %386 = vmatprep.subr.mxu0 0.0
  %387 = vmatpush2.msra.mxu0 0.0
  %388 = vmatprep.subr.mxu0 0.0
  %389 = vmatpush2.msra.mxu0 0.0
  %390 = vmatprep.subr.mxu0 0.0
  %391 = vmatpush2.msra.mxu0 0.0
  %392 = vmatprep.subr.mxu0 0.0
  %393 = vmatpush2.msra.mxu0 0.0
  %394 = vmatprep.subr.mxu0 0.0
  %395 = vmatpush2.msra.mxu0 0.0
  %396 = vmatprep.subr.mxu0 0.0
  %397 = vmatpush2.msra.mxu0 0.0
  %398 = vmatprep.subr.mxu0 0.0
  %399 = vmatpush2.msra.mxu0 0.0
  %400 = vmatprep.subr.mxu0 0.0
  %401 = vmatpush2.msra.mxu0 0.0
  %402 = vmatprep.subr.mxu0 0.0
  %403 = vmatpush2.msra.mxu0 0.0
  %404 = vmatprep.subr.mxu0 0.0
  %405 = vmatpush2.msra.mxu0 0.0
  %406 = vmatprep.subr.mxu0 0.0
  %407 = vmatpush2.msra.mxu0 0.0
  %408 = vmatprep.subr.mxu0 0.0
  %409 = vmatpush2.msra.mxu0 0.0
  %410 = vmatprep.subr.mxu0 0.0
  %411 = vmatpush2.msra.mxu0 0.0
  %412 = vmatprep.mubr.f32.mxu0 0.0
  %413 = vmatmul.mubr.f32.gmra.mxu0 %v346
  %v414 = vpop.f32.mrf.mxu0
  %v415 = vadd.f32 0.0, %v414
  %v416 = vpop.f32.mrf.mxu0
  %v417 = vadd.f32 0.0, %v416
  %418 = vdwg.mxu0
  %v419 = vadd.f32 %v343, %v415
  %v420 = vadd.f32 %v344, %v417
  %v421 = vxor.u32 %v419, 2147483648
  %v422 = vxor.u32 %v420, 2147483648
  %v423 = vmul.f32 %v421, 1.442695
  %v424 = vpow.pop %v423
  %v425 = vmul.f32 %v422, 1.442695
  %v426 = vpow.pop %v425
  %v427 = vadd.f32 %v424, 1.0
  %v428 = vadd.f32 %v426, 1.0
  %v429 = vrcp.pop %v427
  %v430 = vmul.f32 1.0, %v429
  %v431 = vrcp.pop %v428
  %v432 = vmul.f32 1.0, %v431
  %v433 = vtanh.pop %v420
  %v434 = vmul.f32 %v430, %v333
  %436 = vrot.lane.b32.xlu0 %v433, 64
  %v437 = vpop.permute.xlu0 %436
  %v439 = vmul.f32 %v430, %v437
  %441 = vrot.lane.b32.xlu0 %v439, 64
  %v442 = vpop.permute.xlu0 %441
  %v444 = vadd.f32 %v434, %v442
  %v445 = vtanh.pop %v444
  %447 = vrot.lane.b32.xlu0 %v445, 64
  %v448 = vpop.permute.xlu0 %447
  %v450 = vmul.f32 %v432, %v448
  %s451 = smul.u32 2, 2
  %s452 = smul.addr %s451, 8
  %s453 = scalar_lea.vmem [#allocation2], %s452
  %v454 = vld [vmem:[%s453] sm:$0xff]
  %v455 = vld [vmem:[%s453 + $0x8] sm:$0xff]
  %v457 = vsel %vm59, %v450, 0
  %459 = vmatprep.subr.mxu0 0.0
  %460 = vmatpush1.msra.mxu0 0.0
  %461 = vmatprep.subr.mxu0 0.0
  %462 = vmatpush1.msra.mxu0 0.0
  %463 = vmatprep.subr.mxu0 0.0
  %464 = vmatpush1.msra.mxu0 0.0
  %465 = vmatprep.subr.mxu0 0.0
  %466 = vmatpush1.msra.mxu0 0.0
  %467 = vmatprep.subr.mxu0 0.0
  %468 = vmatpush1.msra.mxu0 0.0
  %469 = vmatprep.subr.mxu0 0.0
  %470 = vmatpush1.msra.mxu0 0.0
  %471 = vmatprep.subr.mxu0 0.0
  %472 = vmatpush1.msra.mxu0 0.0
  %473 = vmatprep.subr.mxu0 0.0
  %474 = vmatpush1.msra.mxu0 0.0
  %475 = vmatprep.subr.mxu0 %v228
  %476 = vmatpush1.msra.mxu0 %v227
  %477 = vmatprep.subr.mxu0 %v226
  %478 = vmatpush1.msra.mxu0 %v225
  %479 = vmatprep.subr.mxu0 %v224
  %480 = vmatpush1.msra.mxu0 %v223
  %481 = vmatprep.subr.mxu0 %v222
  %482 = vmatpush1.msra.mxu0 %v221
  %483 = vmatprep.subr.mxu0 %v220
  %484 = vmatpush1.msra.mxu0 %v219
  %485 = vmatprep.subr.mxu0 %v218
  %486 = vmatpush1.msra.mxu0 %v217
  %487 = vmatprep.subr.mxu0 %v216
  %488 = vmatpush1.msra.mxu0 %v215
  %489 = vmatprep.subr.mxu0 %v214
  %490 = vmatpush1.msra.mxu0 %v213
  %491 = vmatprep.subr.mxu0 0.0
  %492 = vmatpush2.msra.mxu0 0.0
  %493 = vmatprep.subr.mxu0 0.0
  %494 = vmatpush2.msra.mxu0 0.0
  %495 = vmatprep.subr.mxu0 0.0
  %496 = vmatpush2.msra.mxu0 0.0
  %497 = vmatprep.subr.mxu0 0.0
  %498 = vmatpush2.msra.mxu0 0.0
  %499 = vmatprep.subr.mxu0 0.0
  %500 = vmatpush2.msra.mxu0 0.0
  %501 = vmatprep.subr.mxu0 0.0
  %502 = vmatpush2.msra.mxu0 0.0
  %503 = vmatprep.subr.mxu0 0.0
  %504 = vmatpush2.msra.mxu0 0.0
  %505 = vmatprep.subr.mxu0 0.0
  %506 = vmatpush2.msra.mxu0 0.0
  %507 = vmatprep.subr.mxu0 0.0
  %508 = vmatpush2.msra.mxu0 0.0
  %509 = vmatprep.subr.mxu0 0.0
  %510 = vmatpush2.msra.mxu0 0.0
  %511 = vmatprep.subr.mxu0 0.0
  %512 = vmatpush2.msra.mxu0 0.0
  %513 = vmatprep.subr.mxu0 0.0
  %514 = vmatpush2.msra.mxu0 0.0
  %515 = vmatprep.subr.mxu0 0.0
  %516 = vmatpush2.msra.mxu0 0.0
  %517 = vmatprep.subr.mxu0 0.0
  %518 = vmatpush2.msra.mxu0 0.0
  %519 = vmatprep.subr.mxu0 0.0
  %520 = vmatpush2.msra.mxu0 0.0
  %521 = vmatprep.subr.mxu0 0.0
  %522 = vmatpush2.msra.mxu0 0.0
  %523 = vmatprep.mubr.f32.mxu0 0.0
  %524 = vmatmul.mubr.f32.gmra.mxu0 %v457
  %v525 = vpop.f32.mrf.mxu0
  %v526 = vadd.f32 0.0, %v525
  %v527 = vpop.f32.mrf.mxu0
  %v528 = vadd.f32 0.0, %v527
  %529 = vdwg.mxu0
  %v530 = vadd.f32 %v454, %v526
  %v531 = vadd.f32 %v455, %v528
  %v532 = vxor.u32 %v530, 2147483648
  %v533 = vxor.u32 %v531, 2147483648
  %v534 = vmul.f32 %v532, 1.442695
  %v535 = vpow.pop %v534
  %v536 = vmul.f32 %v533, 1.442695
  %v537 = vpow.pop %v536
  %v538 = vadd.f32 %v535, 1.0
  %v539 = vadd.f32 %v537, 1.0
  %v540 = vrcp.pop %v538
  %v541 = vmul.f32 1.0, %v540
  %v542 = vrcp.pop %v539
  %v543 = vmul.f32 1.0, %v542
  %v544 = vtanh.pop %v531
  %v545 = vmul.f32 %v541, %v444
  %547 = vrot.lane.b32.xlu0 %v544, 64
  %v548 = vpop.permute.xlu0 %547
  %v550 = vmul.f32 %v541, %v548
  %552 = vrot.lane.b32.xlu0 %v550, 64
  %v553 = vpop.permute.xlu0 %552
  %v555 = vadd.f32 %v545, %v553
  %v556 = vtanh.pop %v555
  %558 = vrot.lane.b32.xlu0 %v556, 64
  %v559 = vpop.permute.xlu0 %558
  %v561 = vmul.f32 %v543, %v559
  %s562 = smul.u32 3, 2
  %s563 = smul.addr %s562, 8
  %s564 = scalar_lea.vmem [#allocation2], %s563
  %v565 = vld [vmem:[%s564] sm:$0xff]
  %v566 = vld [vmem:[%s564 + $0x8] sm:$0xff]
  %v568 = vsel %vm59, %v561, 0
  %570 = vmatprep.subr.mxu0 0.0
  %571 = vmatpush1.msra.mxu0 0.0
  %572 = vmatprep.subr.mxu0 0.0
  %573 = vmatpush1.msra.mxu0 0.0
  %574 = vmatprep.subr.mxu0 0.0
  %575 = vmatpush1.msra.mxu0 0.0
  %576 = vmatprep.subr.mxu0 0.0
  %577 = vmatpush1.msra.mxu0 0.0
  %578 = vmatprep.subr.mxu0 0.0
  %579 = vmatpush1.msra.mxu0 0.0
  %580 = vmatprep.subr.mxu0 0.0
  %581 = vmatpush1.msra.mxu0 0.0
  %582 = vmatprep.subr.mxu0 0.0
  %583 = vmatpush1.msra.mxu0 0.0
  %584 = vmatprep.subr.mxu0 0.0
  %585 = vmatpush1.msra.mxu0 0.0
  %586 = vmatprep.subr.mxu0 %v228
  %587 = vmatpush1.msra.mxu0 %v227
  %588 = vmatprep.subr.mxu0 %v226
  %589 = vmatpush1.msra.mxu0 %v225
  %590 = vmatprep.subr.mxu0 %v224
  %591 = vmatpush1.msra.mxu0 %v223
  %592 = vmatprep.subr.mxu0 %v222
  %593 = vmatpush1.msra.mxu0 %v221
  %594 = vmatprep.subr.mxu0 %v220
  %595 = vmatpush1.msra.mxu0 %v219
  %596 = vmatprep.subr.mxu0 %v218
  %597 = vmatpush1.msra.mxu0 %v217
  %598 = vmatprep.subr.mxu0 %v216
  %599 = vmatpush1.msra.mxu0 %v215
  %600 = vmatprep.subr.mxu0 %v214
  %601 = vmatpush1.msra.mxu0 %v213
  %602 = vmatprep.subr.mxu0 0.0
  %603 = vmatpush2.msra.mxu0 0.0
  %604 = vmatprep.subr.mxu0 0.0
  %605 = vmatpush2.msra.mxu0 0.0
  %606 = vmatprep.subr.mxu0 0.0
  %607 = vmatpush2.msra.mxu0 0.0
  %608 = vmatprep.subr.mxu0 0.0
  %609 = vmatpush2.msra.mxu0 0.0
  %610 = vmatprep.subr.mxu0 0.0
  %611 = vmatpush2.msra.mxu0 0.0
  %612 = vmatprep.subr.mxu0 0.0
  %613 = vmatpush2.msra.mxu0 0.0
  %614 = vmatprep.subr.mxu0 0.0
  %615 = vmatpush2.msra.mxu0 0.0
  %616 = vmatprep.subr.mxu0 0.0
  %617 = vmatpush2.msra.mxu0 0.0
  %618 = vmatprep.subr.mxu0 0.0
  %619 = vmatpush2.msra.mxu0 0.0
  %620 = vmatprep.subr.mxu0 0.0
  %621 = vmatpush2.msra.mxu0 0.0
  %622 = vmatprep.subr.mxu0 0.0
  %623 = vmatpush2.msra.mxu0 0.0
  %624 = vmatprep.subr.mxu0 0.0
  %625 = vmatpush2.msra.mxu0 0.0
  %626 = vmatprep.subr.mxu0 0.0
  %627 = vmatpush2.msra.mxu0 0.0
  %628 = vmatprep.subr.mxu0 0.0
  %629 = vmatpush2.msra.mxu0 0.0
  %630 = vmatprep.subr.mxu0 0.0
  %631 = vmatpush2.msra.mxu0 0.0
  %632 = vmatprep.subr.mxu0 0.0
  %633 = vmatpush2.msra.mxu0 0.0
  %634 = vmatprep.mubr.f32.mxu0 0.0
  %635 = vmatmul.mubr.f32.gmra.mxu0 %v568
  %v636 = vpop.f32.mrf.mxu0
  %v637 = vadd.f32 0.0, %v636
  %v638 = vpop.f32.mrf.mxu0
  %v639 = vadd.f32 0.0, %v638
  %640 = vdwg.mxu0
  %v641 = vadd.f32 %v565, %v637
  %v642 = vadd.f32 %v566, %v639
  %v643 = vxor.u32 %v641, 2147483648
  %v644 = vxor.u32 %v642, 2147483648
  %v645 = vmul.f32 %v643, 1.442695
  %v646 = vpow.pop %v645
  %v647 = vmul.f32 %v644, 1.442695
  %v648 = vpow.pop %v647
  %v649 = vadd.f32 %v646, 1.0
  %v650 = vadd.f32 %v648, 1.0
  %v651 = vrcp.pop %v649
  %v652 = vmul.f32 1.0, %v651
  %v653 = vrcp.pop %v650
  %v654 = vmul.f32 1.0, %v653
  %v655 = vtanh.pop %v642
  %v656 = vmul.f32 %v652, %v555
  %658 = vrot.lane.b32.xlu0 %v655, 64
  %v659 = vpop.permute.xlu0 %658
  %v661 = vmul.f32 %v652, %v659
  %663 = vrot.lane.b32.xlu0 %v661, 64
  %v664 = vpop.permute.xlu0 %663
  %v666 = vadd.f32 %v656, %v664
  %v667 = vtanh.pop %v666
  %669 = vrot.lane.b32.xlu0 %v667, 64
  %v670 = vpop.permute.xlu0 %669
  %v672 = vmul.f32 %v654, %v670
  %s673 = smul.u32 4, 2
  %s674 = smul.addr %s673, 8
  %s675 = scalar_lea.vmem [#allocation2], %s674
  %v676 = vld [vmem:[%s675] sm:$0xff]
  %v677 = vld [vmem:[%s675 + $0x8] sm:$0xff]
  %v679 = vsel %vm59, %v672, 0
  %681 = vmatprep.subr.mxu0 0.0
  %682 = vmatpush1.msra.mxu0 0.0
  %683 = vmatprep.subr.mxu0 0.0
  %684 = vmatpush1.msra.mxu0 0.0
  %685 = vmatprep.subr.mxu0 0.0
  %686 = vmatpush1.msra.mxu0 0.0
  %687 = vmatprep.subr.mxu0 0.0
  %688 = vmatpush1.msra.mxu0 0.0
  %689 = vmatprep.subr.mxu0 0.0
  %690 = vmatpush1.msra.mxu0 0.0
  %691 = vmatprep.subr.mxu0 0.0
  %692 = vmatpush1.msra.mxu0 0.0
  %693 = vmatprep.subr.mxu0 0.0
  %694 = vmatpush1.msra.mxu0 0.0
  %695 = vmatprep.subr.mxu0 0.0
  %696 = vmatpush1.msra.mxu0 0.0
  %697 = vmatprep.subr.mxu0 %v228
  %698 = vmatpush1.msra.mxu0 %v227
  %699 = vmatprep.subr.mxu0 %v226
  %700 = vmatpush1.msra.mxu0 %v225
  %701 = vmatprep.subr.mxu0 %v224
  %702 = vmatpush1.msra.mxu0 %v223
  %703 = vmatprep.subr.mxu0 %v222
  %704 = vmatpush1.msra.mxu0 %v221
  %705 = vmatprep.subr.mxu0 %v220
  %706 = vmatpush1.msra.mxu0 %v219
  %707 = vmatprep.subr.mxu0 %v218
  %708 = vmatpush1.msra.mxu0 %v217
  %709 = vmatprep.subr.mxu0 %v216
  %710 = vmatpush1.msra.mxu0 %v215
  %711 = vmatprep.subr.mxu0 %v214
  %712 = vmatpush1.msra.mxu0 %v213
  %713 = vmatprep.subr.mxu0 0.0
  %714 = vmatpush2.msra.mxu0 0.0
  %715 = vmatprep.subr.mxu0 0.0
  %716 = vmatpush2.msra.mxu0 0.0
  %717 = vmatprep.subr.mxu0 0.0
  %718 = vmatpush2.msra.mxu0 0.0
  %719 = vmatprep.subr.mxu0 0.0
  %720 = vmatpush2.msra.mxu0 0.0
  %721 = vmatprep.subr.mxu0 0.0
  %722 = vmatpush2.msra.mxu0 0.0
  %723 = vmatprep.subr.mxu0 0.0
  %724 = vmatpush2.msra.mxu0 0.0
  %725 = vmatprep.subr.mxu0 0.0
  %726 = vmatpush2.msra.mxu0 0.0
  %727 = vmatprep.subr.mxu0 0.0
  %728 = vmatpush2.msra.mxu0 0.0
  %729 = vmatprep.subr.mxu0 0.0
  %730 = vmatpush2.msra.mxu0 0.0
  %731 = vmatprep.subr.mxu0 0.0
  %732 = vmatpush2.msra.mxu0 0.0
  %733 = vmatprep.subr.mxu0 0.0
  %734 = vmatpush2.msra.mxu0 0.0
  %735 = vmatprep.subr.mxu0 0.0
  %736 = vmatpush2.msra.mxu0 0.0
  %737 = vmatprep.subr.mxu0 0.0
  %738 = vmatpush2.msra.mxu0 0.0
  %739 = vmatprep.subr.mxu0 0.0
  %740 = vmatpush2.msra.mxu0 0.0
  %741 = vmatprep.subr.mxu0 0.0
  %742 = vmatpush2.msra.mxu0 0.0
  %743 = vmatprep.subr.mxu0 0.0
  %744 = vmatpush2.msra.mxu0 0.0
  %745 = vmatprep.mubr.f32.mxu0 0.0
  %746 = vmatmul.mubr.f32.gmra.mxu0 %v679
  %v747 = vpop.f32.mrf.mxu0
  %v748 = vadd.f32 0.0, %v747
  %v749 = vpop.f32.mrf.mxu0
  %v750 = vadd.f32 0.0, %v749
  %751 = vdwg.mxu0
  %v752 = vadd.f32 %v676, %v748
  %v753 = vadd.f32 %v677, %v750
  %v754 = vxor.u32 %v752, 2147483648
  %v755 = vxor.u32 %v753, 2147483648
  %v756 = vmul.f32 %v754, 1.442695
  %v757 = vpow.pop %v756
  %v758 = vmul.f32 %v755, 1.442695
  %v759 = vpow.pop %v758
  %v760 = vadd.f32 %v757, 1.0
  %v761 = vadd.f32 %v759, 1.0
  %v762 = vrcp.pop %v760
  %v763 = vmul.f32 1.0, %v762
  %v764 = vrcp.pop %v761
  %v765 = vmul.f32 1.0, %v764
  %v766 = vtanh.pop %v753
  %v767 = vmul.f32 %v763, %v666
  %769 = vrot.lane.b32.xlu0 %v766, 64
  %v770 = vpop.permute.xlu0 %769
  %v772 = vmul.f32 %v763, %v770
  %774 = vrot.lane.b32.xlu0 %v772, 64
  %v775 = vpop.permute.xlu0 %774
  %v777 = vadd.f32 %v767, %v775
  %v778 = vtanh.pop %v777
  %780 = vrot.lane.b32.xlu0 %v778, 64
  %v781 = vpop.permute.xlu0 %780
  %v783 = vmul.f32 %v765, %v781
  %s784 = smul.u32 5, 2
  %s785 = smul.addr %s784, 8
  %s786 = scalar_lea.vmem [#allocation2], %s785
  %v787 = vld [vmem:[%s786] sm:$0xff]
  %v788 = vld [vmem:[%s786 + $0x8] sm:$0xff]
  %v790 = vsel %vm59, %v783, 0
  %792 = vmatprep.subr.mxu0 0.0
  %793 = vmatpush1.msra.mxu0 0.0
  %794 = vmatprep.subr.mxu0 0.0
  %795 = vmatpush1.msra.mxu0 0.0
  %796 = vmatprep.subr.mxu0 0.0
  %797 = vmatpush1.msra.mxu0 0.0
  %798 = vmatprep.subr.mxu0 0.0
  %799 = vmatpush1.msra.mxu0 0.0
  %800 = vmatprep.subr.mxu0 0.0
  %801 = vmatpush1.msra.mxu0 0.0
  %802 = vmatprep.subr.mxu0 0.0
  %803 = vmatpush1.msra.mxu0 0.0
  %804 = vmatprep.subr.mxu0 0.0
  %805 = vmatpush1.msra.mxu0 0.0
  %806 = vmatprep.subr.mxu0 0.0
  %807 = vmatpush1.msra.mxu0 0.0
  %808 = vmatprep.subr.mxu0 %v228
  %809 = vmatpush1.msra.mxu0 %v227
  %810 = vmatprep.subr.mxu0 %v226
  %811 = vmatpush1.msra.mxu0 %v225
  %812 = vmatprep.subr.mxu0 %v224
  %813 = vmatpush1.msra.mxu0 %v223
  %814 = vmatprep.subr.mxu0 %v222
  %815 = vmatpush1.msra.mxu0 %v221
  %816 = vmatprep.subr.mxu0 %v220
  %817 = vmatpush1.msra.mxu0 %v219
  %818 = vmatprep.subr.mxu0 %v218
  %819 = vmatpush1.msra.mxu0 %v217
  %820 = vmatprep.subr.mxu0 %v216
  %821 = vmatpush1.msra.mxu0 %v215
  %822 = vmatprep.subr.mxu0 %v214
  %823 = vmatpush1.msra.mxu0 %v213
  %824 = vmatprep.subr.mxu0 0.0
  %825 = vmatpush2.msra.mxu0 0.0
  %826 = vmatprep.subr.mxu0 0.0
  %827 = vmatpush2.msra.mxu0 0.0
  %828 = vmatprep.subr.mxu0 0.0
  %829 = vmatpush2.msra.mxu0 0.0
  %830 = vmatprep.subr.mxu0 0.0
  %831 = vmatpush2.msra.mxu0 0.0
  %832 = vmatprep.subr.mxu0 0.0
  %833 = vmatpush2.msra.mxu0 0.0
  %834 = vmatprep.subr.mxu0 0.0
  %835 = vmatpush2.msra.mxu0 0.0
  %836 = vmatprep.subr.mxu0 0.0
  %837 = vmatpush2.msra.mxu0 0.0
  %838 = vmatprep.subr.mxu0 0.0
  %839 = vmatpush2.msra.mxu0 0.0
  %840 = vmatprep.subr.mxu0 0.0
  %841 = vmatpush2.msra.mxu0 0.0
  %842 = vmatprep.subr.mxu0 0.0
  %843 = vmatpush2.msra.mxu0 0.0
  %844 = vmatprep.subr.mxu0 0.0
  %845 = vmatpush2.msra.mxu0 0.0
  %846 = vmatprep.subr.mxu0 0.0
  %847 = vmatpush2.msra.mxu0 0.0
  %848 = vmatprep.subr.mxu0 0.0
  %849 = vmatpush2.msra.mxu0 0.0
  %850 = vmatprep.subr.mxu0 0.0
  %851 = vmatpush2.msra.mxu0 0.0
  %852 = vmatprep.subr.mxu0 0.0
  %853 = vmatpush2.msra.mxu0 0.0
  %854 = vmatprep.subr.mxu0 0.0
  %855 = vmatpush2.msra.mxu0 0.0
  %856 = vmatprep.mubr.f32.mxu0 0.0
  %857 = vmatmul.mubr.f32.gmra.mxu0 %v790
  %v858 = vpop.f32.mrf.mxu0
  %v859 = vadd.f32 0.0, %v858
  %v860 = vpop.f32.mrf.mxu0
  %v861 = vadd.f32 0.0, %v860
  %862 = vdwg.mxu0
  %v863 = vadd.f32 %v787, %v859
  %v864 = vadd.f32 %v788, %v861
  %v865 = vxor.u32 %v863, 2147483648
  %v866 = vxor.u32 %v864, 2147483648
  %v867 = vmul.f32 %v865, 1.442695
  %v868 = vpow.pop %v867
  %v869 = vmul.f32 %v866, 1.442695
  %v870 = vpow.pop %v869
  %v871 = vadd.f32 %v868, 1.0
  %v872 = vadd.f32 %v870, 1.0
  %v873 = vrcp.pop %v871
  %v874 = vmul.f32 1.0, %v873
  %v875 = vrcp.pop %v872
  %v876 = vmul.f32 1.0, %v875
  %v877 = vtanh.pop %v864
  %v878 = vmul.f32 %v874, %v777
  %880 = vrot.lane.b32.xlu0 %v877, 64
  %v881 = vpop.permute.xlu0 %880
  %v883 = vmul.f32 %v874, %v881
  %885 = vrot.lane.b32.xlu0 %v883, 64
  %v886 = vpop.permute.xlu0 %885
  %v888 = vadd.f32 %v878, %v886
  %v889 = vtanh.pop %v888
  %891 = vrot.lane.b32.xlu0 %v889, 64
  %v892 = vpop.permute.xlu0 %891
  %v894 = vmul.f32 %v876, %v892
  %s895 = smul.u32 6, 2
  %s896 = smul.addr %s895, 8
  %s897 = scalar_lea.vmem [#allocation2], %s896
  %v898 = vld [vmem:[%s897] sm:$0xff]
  %v899 = vld [vmem:[%s897 + $0x8] sm:$0xff]
  %v901 = vsel %vm59, %v894, 0
  %903 = vmatprep.subr.mxu0 0.0
  %904 = vmatpush1.msra.mxu0 0.0
  %905 = vmatprep.subr.mxu0 0.0
  %906 = vmatpush1.msra.mxu0 0.0
  %907 = vmatprep.subr.mxu0 0.0
  %908 = vmatpush1.msra.mxu0 0.0
  %909 = vmatprep.subr.mxu0 0.0
  %910 = vmatpush1.msra.mxu0 0.0
  %911 = vmatprep.subr.mxu0 0.0
  %912 = vmatpush1.msra.mxu0 0.0
  %913 = vmatprep.subr.mxu0 0.0
  %914 = vmatpush1.msra.mxu0 0.0
  %915 = vmatprep.subr.mxu0 0.0
  %916 = vmatpush1.msra.mxu0 0.0
  %917 = vmatprep.subr.mxu0 0.0
  %918 = vmatpush1.msra.mxu0 0.0
  %919 = vmatprep.subr.mxu0 %v228
  %920 = vmatpush1.msra.mxu0 %v227
  %921 = vmatprep.subr.mxu0 %v226
  %922 = vmatpush1.msra.mxu0 %v225
  %923 = vmatprep.subr.mxu0 %v224
  %924 = vmatpush1.msra.mxu0 %v223
  %925 = vmatprep.subr.mxu0 %v222
  %926 = vmatpush1.msra.mxu0 %v221
  %927 = vmatprep.subr.mxu0 %v220
  %928 = vmatpush1.msra.mxu0 %v219
  %929 = vmatprep.subr.mxu0 %v218
  %930 = vmatpush1.msra.mxu0 %v217
  %931 = vmatprep.subr.mxu0 %v216
  %932 = vmatpush1.msra.mxu0 %v215
  %933 = vmatprep.subr.mxu0 %v214
  %934 = vmatpush1.msra.mxu0 %v213
  %935 = vmatprep.subr.mxu0 0.0
  %936 = vmatpush2.msra.mxu0 0.0
  %937 = vmatprep.subr.mxu0 0.0
  %938 = vmatpush2.msra.mxu0 0.0
  %939 = vmatprep.subr.mxu0 0.0
  %940 = vmatpush2.msra.mxu0 0.0
  %941 = vmatprep.subr.mxu0 0.0
  %942 = vmatpush2.msra.mxu0 0.0
  %943 = vmatprep.subr.mxu0 0.0
  %944 = vmatpush2.msra.mxu0 0.0
  %945 = vmatprep.subr.mxu0 0.0
  %946 = vmatpush2.msra.mxu0 0.0
  %947 = vmatprep.subr.mxu0 0.0
  %948 = vmatpush2.msra.mxu0 0.0
  %949 = vmatprep.subr.mxu0 0.0
  %950 = vmatpush2.msra.mxu0 0.0
  %951 = vmatprep.subr.mxu0 0.0
  %952 = vmatpush2.msra.mxu0 0.0
  %953 = vmatprep.subr.mxu0 0.0
  %954 = vmatpush2.msra.mxu0 0.0
  %955 = vmatprep.subr.mxu0 0.0
  %956 = vmatpush2.msra.mxu0 0.0
  %957 = vmatprep.subr.mxu0 0.0
  %958 = vmatpush2.msra.mxu0 0.0
  %959 = vmatprep.subr.mxu0 0.0
  %960 = vmatpush2.msra.mxu0 0.0
  %961 = vmatprep.subr.mxu0 0.0
  %962 = vmatpush2.msra.mxu0 0.0
  %963 = vmatprep.subr.mxu0 0.0
  %964 = vmatpush2.msra.mxu0 0.0
  %965 = vmatprep.subr.mxu0 0.0
  %966 = vmatpush2.msra.mxu0 0.0
  %967 = vmatprep.mubr.f32.mxu0 0.0
  %968 = vmatmul.mubr.f32.gmra.mxu0 %v901
  %v969 = vpop.f32.mrf.mxu0
  %v970 = vadd.f32 0.0, %v969
  %v971 = vpop.f32.mrf.mxu0
  %v972 = vadd.f32 0.0, %v971
  %973 = vdwg.mxu0
  %v974 = vadd.f32 %v898, %v970
  %v975 = vadd.f32 %v899, %v972
  %v976 = vxor.u32 %v974, 2147483648
  %v977 = vxor.u32 %v975, 2147483648
  %v978 = vmul.f32 %v976, 1.442695
  %v979 = vpow.pop %v978
  %v980 = vmul.f32 %v977, 1.442695
  %v981 = vpow.pop %v980
  %v982 = vadd.f32 %v979, 1.0
  %v983 = vadd.f32 %v981, 1.0
  %v984 = vrcp.pop %v982
  %v985 = vmul.f32 1.0, %v984
  %v986 = vrcp.pop %v983
  %v987 = vmul.f32 1.0, %v986
  %v988 = vtanh.pop %v975
  %v989 = vmul.f32 %v985, %v888
  %991 = vrot.lane.b32.xlu0 %v988, 64
  %v992 = vpop.permute.xlu0 %991
  %v994 = vmul.f32 %v985, %v992
  %996 = vrot.lane.b32.xlu0 %v994, 64
  %v997 = vpop.permute.xlu0 %996
  %v999 = vadd.f32 %v989, %v997
  %v1000 = vtanh.pop %v999
  %1002 = vrot.lane.b32.xlu0 %v1000, 64
  %v1003 = vpop.permute.xlu0 %1002
  %v1005 = vmul.f32 %v987, %v1003
  %s1006 = smul.u32 7, 2
  %s1007 = smul.addr %s1006, 8
  %s1008 = scalar_lea.vmem [#allocation2], %s1007
  %v1009 = vld [vmem:[%s1008] sm:$0xff]
  %v1010 = vld [vmem:[%s1008 + $0x8] sm:$0xff]
  %v1012 = vsel %vm59, %v1005, 0
  %1014 = vmatprep.subr.mxu0 0.0
  %1015 = vmatpush1.msra.mxu0 0.0
  %1016 = vmatprep.subr.mxu0 0.0
  %1017 = vmatpush1.msra.mxu0 0.0
  %1018 = vmatprep.subr.mxu0 0.0
  %1019 = vmatpush1.msra.mxu0 0.0
  %1020 = vmatprep.subr.mxu0 0.0
  %1021 = vmatpush1.msra.mxu0 0.0
  %1022 = vmatprep.subr.mxu0 0.0
  %1023 = vmatpush1.msra.mxu0 0.0
  %1024 = vmatprep.subr.mxu0 0.0
  %1025 = vmatpush1.msra.mxu0 0.0
  %1026 = vmatprep.subr.mxu0 0.0
  %1027 = vmatpush1.msra.mxu0 0.0
  %1028 = vmatprep.subr.mxu0 0.0
  %1029 = vmatpush1.msra.mxu0 0.0
  %1030 = vmatprep.subr.mxu0 %v228
  %1031 = vmatpush1.msra.mxu0 %v227
  %1032 = vmatprep.subr.mxu0 %v226
  %1033 = vmatpush1.msra.mxu0 %v225
  %1034 = vmatprep.subr.mxu0 %v224
  %1035 = vmatpush1.msra.mxu0 %v223
  %1036 = vmatprep.subr.mxu0 %v222
  %1037 = vmatpush1.msra.mxu0 %v221
  %1038 = vmatprep.subr.mxu0 %v220
  %1039 = vmatpush1.msra.mxu0 %v219
  %1040 = vmatprep.subr.mxu0 %v218
  %1041 = vmatpush1.msra.mxu0 %v217
  %1042 = vmatprep.subr.mxu0 %v216
  %1043 = vmatpush1.msra.mxu0 %v215
  %1044 = vmatprep.subr.mxu0 %v214
  %1045 = vmatpush1.msra.mxu0 %v213
  %1046 = vmatprep.subr.mxu0 0.0
  %1047 = vmatpush2.msra.mxu0 0.0
  %1048 = vmatprep.subr.mxu0 0.0
  %1049 = vmatpush2.msra.mxu0 0.0
  %1050 = vmatprep.subr.mxu0 0.0
  %1051 = vmatpush2.msra.mxu0 0.0
  %1052 = vmatprep.subr.mxu0 0.0
  %1053 = vmatpush2.msra.mxu0 0.0
  %1054 = vmatprep.subr.mxu0 0.0
  %1055 = vmatpush2.msra.mxu0 0.0
  %1056 = vmatprep.subr.mxu0 0.0
  %1057 = vmatpush2.msra.mxu0 0.0
  %1058 = vmatprep.subr.mxu0 0.0
  %1059 = vmatpush2.msra.mxu0 0.0
  %1060 = vmatprep.subr.mxu0 0.0
  %1061 = vmatpush2.msra.mxu0 0.0
  %1062 = vmatprep.subr.mxu0 0.0
  %1063 = vmatpush2.msra.mxu0 0.0
  %1064 = vmatprep.subr.mxu0 0.0
  %1065 = vmatpush2.msra.mxu0 0.0
  %1066 = vmatprep.subr.mxu0 0.0
  %1067 = vmatpush2.msra.mxu0 0.0
  %1068 = vmatprep.subr.mxu0 0.0
  %1069 = vmatpush2.msra.mxu0 0.0
  %1070 = vmatprep.subr.mxu0 0.0
  %1071 = vmatpush2.msra.mxu0 0.0
  %1072 = vmatprep.subr.mxu0 0.0
  %1073 = vmatpush2.msra.mxu0 0.0
  %1074 = vmatprep.subr.mxu0 0.0
  %1075 = vmatpush2.msra.mxu0 0.0
  %1076 = vmatprep.subr.mxu0 0.0
  %1077 = vmatpush2.msra.mxu0 0.0
  %1078 = vmatprep.mubr.f32.mxu0 0.0
  %1079 = vmatmul.mubr.f32.gmra.mxu0 %v1012
  %v1080 = vpop.f32.mrf.mxu0
  %v1081 = vadd.f32 0.0, %v1080
  %v1082 = vpop.f32.mrf.mxu0
  %v1083 = vadd.f32 0.0, %v1082
  %1084 = vdwg.mxu0
  %v1085 = vadd.f32 %v1009, %v1081
  %v1086 = vadd.f32 %v1010, %v1083
  %v1087 = vxor.u32 %v1085, 2147483648
  %v1088 = vxor.u32 %v1086, 2147483648
  %v1089 = vmul.f32 %v1087, 1.442695
  %v1090 = vpow.pop %v1089
  %v1091 = vmul.f32 %v1088, 1.442695
  %v1092 = vpow.pop %v1091
  %v1093 = vadd.f32 %v1090, 1.0
  %v1094 = vadd.f32 %v1092, 1.0
  %v1095 = vrcp.pop %v1093
  %v1096 = vmul.f32 1.0, %v1095
  %v1097 = vrcp.pop %v1094
  %v1098 = vmul.f32 1.0, %v1097
  %v1099 = vtanh.pop %v1086
  %v1100 = vmul.f32 %v1096, %v999
  %1102 = vrot.lane.b32.xlu0 %v1099, 64
  %v1103 = vpop.permute.xlu0 %1102
  %v1105 = vmul.f32 %v1096, %v1103
  %1107 = vrot.lane.b32.xlu0 %v1105, 64
  %v1108 = vpop.permute.xlu0 %1107
  %v1110 = vadd.f32 %v1100, %v1108
  %v1111 = vtanh.pop %v1110
  %1113 = vrot.lane.b32.xlu0 %v1111, 64
  %v1114 = vpop.permute.xlu0 %1113
  %v1116 = vmul.f32 %v1098, %v1114
  %v1117 = vld [vmem:[%s4] sm:$0xff]
  %v1118 = vld [vmem:[%s4 + $0x8] sm:$0xff]
  %v1119 = vld [vmem:[%s4 + $0x10] sm:$0xff]
  %v1120 = vld [vmem:[%s4 + $0x18] sm:$0xff]
  %v1121 = vld [vmem:[%s4 + $0x20] sm:$0xff]
  %v1122 = vld [vmem:[%s4 + $0x28] sm:$0xff]
  %v1123 = vld [vmem:[%s4 + $0x30] sm:$0xff]
  %v1124 = vld [vmem:[%s4 + $0x38] sm:$0xff]
  %v1125 = vld [vmem:[%s5] sm:$0x1]
  %v1127 = vlaneseq
  %v1128 = vshrl.u32 %v1127, 7
  %v1129 = vsub.s32 0, %v1128
  %v1130 = vrot.slane %v1125, %v1129
  %v1133 = vsel %vm59, %v1116, 0
  %1135 = vmatprep.subr.mxu0 0.0
  %1136 = vmatpush1.msra.mxu0 0.0
  %1137 = vmatprep.subr.mxu0 0.0
  %1138 = vmatpush1.msra.mxu0 0.0
  %1139 = vmatprep.subr.mxu0 0.0
  %1140 = vmatpush1.msra.mxu0 0.0
  %1141 = vmatprep.subr.mxu0 0.0
  %1142 = vmatpush1.msra.mxu0 0.0
  %1143 = vmatprep.subr.mxu0 0.0
  %1144 = vmatpush1.msra.mxu0 0.0
  %1145 = vmatprep.subr.mxu0 0.0
  %1146 = vmatpush1.msra.mxu0 0.0
  %1147 = vmatprep.subr.mxu0 0.0
  %1148 = vmatpush1.msra.mxu0 0.0
  %1149 = vmatprep.subr.mxu0 0.0
  %1150 = vmatpush1.msra.mxu0 0.0
  %1151 = vmatprep.subr.mxu0 0.0
  %1152 = vmatpush1.msra.mxu0 %v1124
  %1153 = vmatprep.subr.mxu0 0.0
  %1154 = vmatpush1.msra.mxu0 %v1123
  %1155 = vmatprep.subr.mxu0 0.0
  %1156 = vmatpush1.msra.mxu0 %v1122
  %1157 = vmatprep.subr.mxu0 0.0
  %1158 = vmatpush1.msra.mxu0 %v1121
  %1159 = vmatprep.subr.mxu0 0.0
  %1160 = vmatpush1.msra.mxu0 %v1120
  %1161 = vmatprep.subr.mxu0 0.0
  %1162 = vmatpush1.msra.mxu0 %v1119
  %1163 = vmatprep.subr.mxu0 0.0
  %1164 = vmatpush1.msra.mxu0 %v1118
  %1165 = vmatprep.subr.mxu0 0.0
  %1166 = vmatpush1.msra.mxu0 %v1117
  %1167 = vmatprep.subr.mxu0 0.0
  %1168 = vmatpush2.msra.mxu0 0.0
  %1169 = vmatprep.subr.mxu0 0.0
  %1170 = vmatpush2.msra.mxu0 0.0
  %1171 = vmatprep.subr.mxu0 0.0
  %1172 = vmatpush2.msra.mxu0 0.0
  %1173 = vmatprep.subr.mxu0 0.0
  %1174 = vmatpush2.msra.mxu0 0.0
  %1175 = vmatprep.subr.mxu0 0.0
  %1176 = vmatpush2.msra.mxu0 0.0
  %1177 = vmatprep.subr.mxu0 0.0
  %1178 = vmatpush2.msra.mxu0 0.0
  %1179 = vmatprep.subr.mxu0 0.0
  %1180 = vmatpush2.msra.mxu0 0.0
  %1181 = vmatprep.subr.mxu0 0.0
  %1182 = vmatpush2.msra.mxu0 0.0
  %1183 = vmatprep.subr.mxu0 0.0
  %1184 = vmatpush2.msra.mxu0 0.0
  %1185 = vmatprep.subr.mxu0 0.0
  %1186 = vmatpush2.msra.mxu0 0.0
  %1187 = vmatprep.subr.mxu0 0.0
  %1188 = vmatpush2.msra.mxu0 0.0
  %1189 = vmatprep.subr.mxu0 0.0
  %1190 = vmatpush2.msra.mxu0 0.0
  %1191 = vmatprep.subr.mxu0 0.0
  %1192 = vmatpush2.msra.mxu0 0.0
  %1193 = vmatprep.subr.mxu0 0.0
  %1194 = vmatpush2.msra.mxu0 0.0
  %1195 = vmatprep.subr.mxu0 0.0
  %1196 = vmatpush2.msra.mxu0 0.0
  %1197 = vmatprep.subr.mxu0 0.0
  %1198 = vmatpush2.msra.mxu0 0.0
  %1199 = vmatprep.mubr.f32.mxu0 0.0
  %1200 = vmatmul.mubr.f32.gmra.mxu0 %v1133
  %v1201 = vpop.f32.mrf.mxu0
  %v1202 = vadd.f32 %v1130, %v1201
  %v1203 = vpop.f32.mrf.mxu0
  %1204 = vdwg.mxu0
  %1205 = vst [vmem:[%s6] sm:$0xff] %v1202
  // Predicated region
  $region26: #{intent_classifier_forward.1} parent=0 // pred_check
    _
  $region27: #{intent_classifier_forward.1} parent=0 // pred_check_branch
    %1207 = sbr.rel (0) target = $region29
  $region28: #{intent_classifier_forward.1} parent=0 // pred_region
    _
  $region29: #{intent_classifier_forward.1} parent=0 // pred_fallthru
    _
  // Predicated region
  $region30: #{intent_classifier_forward.1} parent=0 // pred_check
    _
  $region31: #{intent_classifier_forward.1} parent=0 // pred_check_branch
    %1209 = sbr.rel (0) target = $region33
  $region32: #{intent_classifier_forward.1} parent=0 // pred_region
    _
  $region33: #{intent_classifier_forward.1} parent=0 // pred_fallthru
    _

</llo_original>
